<compile_context>
chip_gen: v7x
topology: tpu7x:2x2x1
jax: 0.10.0
libtpu: 0.0.40
codegen_flags: <defaults>
</compile_context>

<pallas_src>
import jax
import jax.numpy as jnp
from jax import lax
from jax.experimental import pallas as pl
from jax.experimental.pallas import tpu as pltpu


def _round_up(x, m):
    return (x + m - 1) // m * m


def _pick_block(total, target, align):
    """Largest divisor of `total` that is <= target and a multiple of `align`.
    The full extent is always legal (full-array block dims bypass the (8,128)
    divisibility rule), so fall back to `total` if no aligned divisor exists."""
    target = max(1, min(target, total))
    for cand in range(target, 0, -1):
        if total % cand == 0 and (cand % align == 0 or cand == total):
            return cand
    return total


# ---------------------------------------------------------------------------
# Single fused kernel: per grid step (batch block, time block):
#   1) block input projection  gx = x_blk @ W_ih + b   (one MXU dot -> VMEM)
#   2) t_blk LSTM cell updates (fori_loop, h/c carried in vregs, W_hh re-read
#      from VMEM each step)
#   3) on the LAST time block: decoder + log_softmax, store lane-dense output
# h/c persist in VMEM scratch across time blocks of the same batch block.
# ---------------------------------------------------------------------------
def lstm_fused_kernel(x_ref, wih_ref, b_ref, whh_ref, wdec_ref, bdec_ref,
                      out_ref, h_scr, c_scr, gx_scr):
    tb = pl.program_id(1)                       # time-block index (innermost!)
    t_blk, b_blk, ninp = x_ref.shape
    Hp = h_scr.shape[1]

    @pl.when(tb == 0)
    def _init():
        h_scr[...] = jnp.zeros_like(h_scr)
        c_scr[...] = jnp.zeros_like(c_scr)

    # --- fused input projection for the whole time block -------------------
    # One (t_blk*b_blk, ninp) @ (ninp, 4Hp) dot amortizes the W_ih weight push
    # over t_blk steps; result lives only in VMEM scratch (no HBM gates_x).
    xb = x_ref[...].astype(jnp.bfloat16).reshape(t_blk * b_blk, ninp)
    gx = (jnp.dot(xb, wih_ref[...], preferred_element_type=jnp.float32)
          + b_ref[...])                          # (t_blk*b_blk, 4Hp) f32
    gx_scr[...] = gx.reshape(t_blk, b_blk, 4 * Hp)

    # --- recurrence over the time block -------------------------------------
    def step(t, carry):
        h, c = carry
        # Re-read W_hh from VMEM inside the loop (do NOT hoist: keeping the
        # full (Hp, 4Hp) weight live across the unroll spills vregs).
        g = gx_scr[t] + jnp.dot(h.astype(jnp.bfloat16), whh_ref[...],
                                preferred_element_type=jnp.float32)
        # Hp is a multiple of 128 -> every gate slice is lane-aligned.
        i_g = jax.nn.sigmoid(g[:, 0 * Hp:1 * Hp])
        f_g = jax.nn.sigmoid(g[:, 1 * Hp:2 * Hp])
        g_g = jnp.tanh(g[:, 2 * Hp:3 * Hp])
        o_g = jax.nn.sigmoid(g[:, 3 * Hp:4 * Hp])
        c = f_g * c + i_g * g_g
        h = o_g * jnp.tanh(c)
        return h, c

    h, c = lax.fori_loop(0, t_blk, step, (h_scr[...], c_scr[...]), unroll=True)
    h_scr[...] = h
    c_scr[...] = c

    # --- fused decoder + log_softmax on the last time block -----------------
    # Padded logit lanes carry bias -1e9, so they vanish from the softmax.
    @pl.when(tb == pl.num_programs(1) - 1)
    def _decode():
        logits = (jnp.dot(h.astype(jnp.bfloat16), wdec_ref[...],
                          preferred_element_type=jnp.float32)
                  + bdec_ref[...])               # (b_blk, NTOKp)
        m = jnp.max(logits, axis=1, keepdims=True)
        z = logits - m
        lse = jnp.log(jnp.sum(jnp.exp(z), axis=1, keepdims=True))
        out_ref[...] = z - lse                   # log_softmax, dim=1


def rnn_model_forward(x, w_ih, w_hh, b_ih, b_hh, w_dec, b_dec,
                      *, t_blk=16, b_blk=128):
    """x: (S, B, ninp) time-major.  w_ih:(ninp,4H)  w_hh:(H,4H)  b_*:(4H,)
       w_dec:(H,ntoken)  b_dec:(ntoken,).  Returns (B, ntoken) log-probs."""
    S, B, ninp = x.shape
    H = w_hh.shape[0]
    ntoken = w_dec.shape[1]
    Hp = _round_up(H, 128)            # lane-align each gate block
    NTOKp = _round_up(ntoken, 128)    # lane-dense decoder output

    # Batch tile: prefer a large, 16-aligned divisor of B (fills MXU rows,
    # bf16-sublane friendly); time tile: any divisor of S up to the target.
    b_blk = _pick_block(B, b_blk, 16)
    t_blk = _pick_block(S, t_blk, 1)

    f32 = jnp.float32

    def pad_gate_cols(w):             # (rows, 4H) -> (rows, 4Hp), zero-pad per gate
        rows = w.shape[0]
        return (jnp.zeros((rows, 4, Hp), f32)
                .at[:, :, :H].set(w.reshape(rows, 4, H).astype(f32))
                .reshape(rows, 4 * Hp))

    # Padded columns give gate preact 0 -> i=f=o=0.5, g=0 -> c_pad=h_pad=0,
    # so padding never contaminates the real lanes.
    w_ih_p = pad_gate_cols(w_ih).astype(jnp.bfloat16)                   # (ninp, 4Hp)
    w_hh_p = (jnp.zeros((Hp, 4 * Hp), f32)
              .at[:H].set(pad_gate_cols(w_hh))).astype(jnp.bfloat16)    # (Hp, 4Hp)
    b_all_p = pad_gate_cols((b_ih + b_hh).reshape(1, 4 * H))            # (1, 4Hp) f32
    w_dec_p = (jnp.zeros((Hp, NTOKp), f32)
               .at[:H, :ntoken].set(w_dec.astype(f32))).astype(jnp.bfloat16)
    b_dec_p = (jnp.full((1, NTOKp), -1e9, f32)
               .at[0, :ntoken].set(b_dec.astype(f32)))                  # (1, NTOKp)

    x = x.astype(f32)   # cast to bf16 inside the kernel; x traffic is tiny

    # Grid: (batch blocks ["parallel"], time blocks ["arbitrary"]).
    # Time MUST stay the innermost (last) grid axis: the h/c VMEM carry and
    # the last-time-block decode both rely on it.
    grid = (B // b_blk, S // t_blk)

    logp_p = pl.pallas_call(
        lstm_fused_kernel,
        out_shape=jax.ShapeDtypeStruct((B, NTOKp), f32),
        grid_spec=pltpu.PrefetchScalarGridSpec(
            num_scalar_prefetch=0,
            grid=grid,
            in_specs=[
                pl.BlockSpec((t_blk, b_blk, ninp), lambda b, t: (t, b, 0)),
                pl.BlockSpec((ninp, 4 * Hp), lambda b, t: (0, 0)),
                pl.BlockSpec((1, 4 * Hp), lambda b, t: (0, 0)),
                pl.BlockSpec((Hp, 4 * Hp), lambda b, t: (0, 0)),
                pl.BlockSpec((Hp, NTOKp), lambda b, t: (0, 0)),
                pl.BlockSpec((1, NTOKp), lambda b, t: (0, 0)),
            ],
            out_specs=pl.BlockSpec((b_blk, NTOKp), lambda b, t: (b, 0)),
            scratch_shapes=[
                pltpu.VMEM((b_blk, Hp), f32),             # h carry
                pltpu.VMEM((b_blk, Hp), f32),             # c carry
                pltpu.VMEM((t_blk, b_blk, 4 * Hp), f32),  # block gate preacts
            ],
        ),
        compiler_params=pltpu.CompilerParams(
            dimension_semantics=("parallel", "arbitrary")),
    )(x, w_ih_p, b_all_p, w_hh_p, w_dec_p, b_dec_p)

    return logp_p[:, :ntoken]


def ref_forward(x, w_ih, w_hh, b_ih, b_hh, w_dec, b_dec):
    """Pure-JAX f32 reference (mirrors torch.nn.LSTM + Linear + log_softmax)."""
    S, B, _ = x.shape
    H = w_hh.shape[0]
    h = jnp.zeros((B, H), jnp.float32)
    c = jnp.zeros((B, H), jnp.float32)
    b = b_ih + b_hh
    for t in range(S):
        gates = x[t] @ w_ih + h @ w_hh + b
        i_g = jax.nn.sigmoid(gates[:, 0 * H:1 * H])
        f_g = jax.nn.sigmoid(gates[:, 1 * H:2 * H])
        g_g = jnp.tanh(gates[:, 2 * H:3 * H])
        o_g = jax.nn.sigmoid(gates[:, 3 * H:4 * H])
        c = f_g * c + i_g * g_g
        h = o_g * jnp.tanh(c)
    logits = h @ w_dec + b_dec
    return jax.nn.log_softmax(logits, axis=1)


def make_params(key, ninp, nhid, ntoken):
    """Deterministic parameters matching RNNModel.init_weights() semantics."""
    k1, k2, k3, k4 = jax.random.split(key, 4)

    # weight_ih_l0: (4H, ninp) orthogonal init -> stored transposed (ninp, 4H)
    a = jax.random.normal(k1, (4 * nhid, ninp), jnp.float32)
    q, _ = jnp.linalg.qr(a)                       # (4H, ninp), orthonormal columns
    w_ih = q.T.astype(jnp.float32)                # (ninp, 4H)

    # weight_hh_l0: cat of 4 identities along dim 0 -> transposed (H, 4H)
    w_hh = jnp.concatenate([jnp.eye(nhid, dtype=jnp.float32)] * 4, axis=1)

    # biases: default uniform(-1/sqrt(H), 1/sqrt(H)); forget block set to 10.0
    # on BOTH b_ih and b_hh (init_weights fills every '*bias*' tensor).
    kb = 1.0 / jnp.sqrt(jnp.float32(nhid))
    b_ih = jax.random.uniform(k2, (4 * nhid,), jnp.float32, -kb, kb)
    b_hh = jax.random.uniform(k3, (4 * nhid,), jnp.float32, -kb, kb)
    b_ih = b_ih.at[nhid:2 * nhid].set(10.0)
    b_hh = b_hh.at[nhid:2 * nhid].set(10.0)

    # decoder: weight uniform(-0.1, 0.1) of shape (ntoken, H) -> stored (H, ntoken)
    w_dec = jax.random.uniform(k4, (ntoken, nhid), jnp.float32, -0.1, 0.1).T
    b_dec = jnp.zeros((ntoken,), jnp.float32)
    return w_ih, w_hh, b_ih, b_hh, w_dec, b_dec


if __name__ == "__main__":
    # Small shapes: seq=8, batch=8, ninp=32, nhid=32, ntoken=16
    S, B, NINP, NHID, NTOKEN = 8, 8, 32, 32, 16

    key = jax.random.PRNGKey(0)
    kx, kp = jax.random.split(key)
    x = jax.random.normal(kx, (S, B, NINP), jnp.float32)   # (seq, batch, ninp)

    params = make_params(kp, NINP, NHID, NTOKEN)

    # t_blk=4 -> two time blocks, exercising the h/c carry across grid steps
    # and the last-block decoder fusion.
    out = rnn_model_forward(x, *params, t_blk=4, b_blk=8)
    out = jax.block_until_ready(out)

    ref = ref_forward(x, *params)
    assert out.shape == (B, NTOKEN)
    # bf16 weights/x with f32 accumulation -> slightly looser tolerance vs f32 ref
    assert jnp.allclose(out, ref, atol=2e-2), "mismatch vs JAX reference"

    print("KERNEL_OK")
</pallas_src>

<mosaic_0001>
module attributes {stable_mosaic.version = 11 : i64} {
  func.func @lstm_fused_kernel(%arg0: i32, %arg1: i32, %arg2: memref<4x8x32xf32, #tpu.memory_space<vmem>>, %arg3: memref<32x512xbf16, #tpu.memory_space<vmem>>, %arg4: memref<1x512xf32, #tpu.memory_space<vmem>>, %arg5: memref<128x512xbf16, #tpu.memory_space<vmem>>, %arg6: memref<128x128xbf16, #tpu.memory_space<vmem>>, %arg7: memref<1x128xf32, #tpu.memory_space<vmem>>, %arg8: memref<8x128xf32, #tpu.memory_space<vmem>>, %arg9: memref<8x128xf32, #tpu.memory_space<vmem>>, %arg10: memref<8x128xf32, #tpu.memory_space<vmem>>, %arg11: memref<4x8x512xf32, #tpu.memory_space<vmem>>) attributes {dimension_semantics = [#tpu.dimension_semantics<parallel>, #tpu.dimension_semantics<arbitrary>], iteration_bounds = array<i64: 1, 2>, scalar_prefetch = 0 : i64, scratch_operands = 3 : i64, tpu.core_type = #tpu.core_type<tc>, window_params = [{transform_indices = @transform_0, window_bounds = array<i64: 4, 8, 32>}, {pipeline_mode = #tpu.pipeline_mode<synchronous>, transform_indices = @transform_1, window_bounds = array<i64: 32, 512>}, {pipeline_mode = #tpu.pipeline_mode<synchronous>, transform_indices = @transform_2, window_bounds = array<i64: 1, 512>}, {pipeline_mode = #tpu.pipeline_mode<synchronous>, transform_indices = @transform_3, window_bounds = array<i64: 128, 512>}, {pipeline_mode = #tpu.pipeline_mode<synchronous>, transform_indices = @transform_4, window_bounds = array<i64: 128, 128>}, {pipeline_mode = #tpu.pipeline_mode<synchronous>, transform_indices = @transform_5, window_bounds = array<i64: 1, 128>}, {transform_indices = @transform_6, window_bounds = array<i64: 8, 128>}]} {
    %c0_i32 = arith.constant 0 : i32
    %0 = arith.cmpi eq, %arg1, %c0_i32 : i32
    %1 = arith.extui %0 : i1 to i32
    %c0_i32_0 = arith.constant 0 : i32
    %2 = arith.cmpi ne, %1, %c0_i32_0 : i32
    scf.if %2 {
      %cst_53 = arith.constant 0.000000e+00 : f32
      %148 = vector.broadcast %cst_53 : f32 to vector<8x128xf32>
      %c0_54 = arith.constant 0 : index
      %c0_55 = arith.constant 0 : index
      %149 = vector.load %arg9[%c0_54, %c0_55] : memref<8x128xf32, #tpu.memory_space<vmem>>, vector<8x128xf32>
      tpu.vector_store %arg9[%c0_54, %c0_55], %148 {strides = array<i32>} : memref<8x128xf32, #tpu.memory_space<vmem>>, vector<8x128xf32>,
      %cst_56 = arith.constant 0.000000e+00 : f32
      %150 = vector.broadcast %cst_56 : f32 to vector<8x128xf32>
      %c0_57 = arith.constant 0 : index
      %c0_58 = arith.constant 0 : index
      %151 = vector.load %arg10[%c0_57, %c0_58] : memref<8x128xf32, #tpu.memory_space<vmem>>, vector<8x128xf32>
      tpu.vector_store %arg10[%c0_57, %c0_58], %150 {strides = array<i32>} : memref<8x128xf32, #tpu.memory_space<vmem>>, vector<8x128xf32>,
    } else {
    }
    %c0 = arith.constant 0 : index
    %c0_1 = arith.constant 0 : index
    %c0_2 = arith.constant 0 : index
    %3 = vector.load %arg2[%c0, %c0_1, %c0_2] : memref<4x8x32xf32, #tpu.memory_space<vmem>>, vector<4x8x32xf32>
    %4 = arith.truncf %3 : vector<4x8x32xf32> to vector<4x8x32xbf16>
    %5 = vector.shape_cast %4 : vector<4x8x32xbf16> to vector<32x32xbf16>
    %c0_3 = arith.constant 0 : index
    %c0_4 = arith.constant 0 : index
    %6 = vector.load %arg3[%c0_3, %c0_4] : memref<32x512xbf16, #tpu.memory_space<vmem>>, vector<32x512xbf16>
    %cst = arith.constant dense<0.000000e+00> : vector<32x512xf32>
    %7 = tpu.matmul %5, %6, %cst {dimension_numbers = #tpu.dot_dimension_numbers<[1], [0], [0], [1], [0, 0, 1, 1], [], []>} : vector<32x32xbf16>, vector<32x512xbf16>, vector<32x512xf32> -> vector<32x512xf32>
    %c0_5 = arith.constant 0 : index
    %c0_6 = arith.constant 0 : index
    %8 = vector.load %arg4[%c0_5, %c0_6] : memref<1x512xf32, #tpu.memory_space<vmem>>, vector<1x512xf32>
    %9 = vector.broadcast %8 : vector<1x512xf32> to vector<32x512xf32>
    %10 = arith.addf %7, %9 : vector<32x512xf32>
    %11 = vector.shape_cast %10 : vector<32x512xf32> to vector<4x8x512xf32>
    %c0_7 = arith.constant 0 : index
    %c0_8 = arith.constant 0 : index
    %c0_9 = arith.constant 0 : index
    %12 = vector.load %arg11[%c0_7, %c0_8, %c0_9] : memref<4x8x512xf32, #tpu.memory_space<vmem>>, vector<4x8x512xf32>
    tpu.vector_store %arg11[%c0_7, %c0_8, %c0_9], %11 {strides = array<i32>} : memref<4x8x512xf32, #tpu.memory_space<vmem>>, vector<4x8x512xf32>,
    %c0_10 = arith.constant 0 : index
    %c0_11 = arith.constant 0 : index
    %13 = vector.load %arg9[%c0_10, %c0_11] : memref<8x128xf32, #tpu.memory_space<vmem>>, vector<8x128xf32>
    %c0_12 = arith.constant 0 : index
    %c0_13 = arith.constant 0 : index
    %14 = vector.load %arg10[%c0_12, %c0_13] : memref<8x128xf32, #tpu.memory_space<vmem>>, vector<8x128xf32>
    %c0_i32_14 = arith.constant 0 : i32
    %15 = arith.index_cast %c0_i32_14 : i32 to index
    %c0_15 = arith.constant 0 : index
    %c0_16 = arith.constant 0 : index
    %16 = vector.load %arg11[%15, %c0_15, %c0_16] : memref<4x8x512xf32, #tpu.memory_space<vmem>>, vector<1x8x512xf32>
    %17 = vector.shape_cast %16 : vector<1x8x512xf32> to vector<8x512xf32>
    %18 = arith.truncf %13 : vector<8x128xf32> to vector<8x128xbf16>
    %c0_17 = arith.constant 0 : index
    %c0_18 = arith.constant 0 : index
    %19 = vector.load %arg5[%c0_17, %c0_18] : memref<128x512xbf16, #tpu.memory_space<vmem>>, vector<128x512xbf16>
    %cst_19 = arith.constant dense<0.000000e+00> : vector<8x512xf32>
    %20 = tpu.matmul %18, %19, %cst_19 {dimension_numbers = #tpu.dot_dimension_numbers<[1], [0], [0], [1], [0, 0, 1, 1], [], []>} : vector<8x128xbf16>, vector<128x512xbf16>, vector<8x512xf32> -> vector<8x512xf32>
    %21 = arith.addf %17, %20 : vector<8x512xf32>
    %22 = vector.extract_strided_slice %21 {offsets = [0, 0], sizes = [8, 128], strides = [1, 1]} : vector<8x512xf32> to vector<8x128xf32>
    %23 = arith.negf %22 : vector<8x128xf32>
    %24 = math.exp %23 : vector<8x128xf32>
    %cst_20 = arith.constant 1.000000e+00 : f32
    %25 = vector.broadcast %cst_20 : f32 to vector<8x128xf32>
    %26 = arith.addf %25, %24 : vector<8x128xf32>
    %27 = arith.divf %25, %26 : vector<8x128xf32>
    %28 = vector.extract_strided_slice %21 {offsets = [0, 128], sizes = [8, 128], strides = [1, 1]} : vector<8x512xf32> to vector<8x128xf32>
    %29 = arith.negf %28 : vector<8x128xf32>
    %30 = math.exp %29 : vector<8x128xf32>
    %cst_21 = arith.constant 1.000000e+00 : f32
    %31 = vector.broadcast %cst_21 : f32 to vector<8x128xf32>
    %32 = arith.addf %31, %30 : vector<8x128xf32>
    %33 = arith.divf %31, %32 : vector<8x128xf32>
    %34 = vector.extract_strided_slice %21 {offsets = [0, 256], sizes = [8, 128], strides = [1, 1]} : vector<8x512xf32> to vector<8x128xf32>
    %35 = math.tanh %34 : vector<8x128xf32>
    %36 = vector.extract_strided_slice %21 {offsets = [0, 384], sizes = [8, 128], strides = [1, 1]} : vector<8x512xf32> to vector<8x128xf32>
    %37 = arith.negf %36 : vector<8x128xf32>
    %38 = math.exp %37 : vector<8x128xf32>
    %cst_22 = arith.constant 1.000000e+00 : f32
    %39 = vector.broadcast %cst_22 : f32 to vector<8x128xf32>
    %40 = arith.addf %39, %38 : vector<8x128xf32>
    %41 = arith.divf %39, %40 : vector<8x128xf32>
    %42 = arith.mulf %33, %14 : vector<8x128xf32>
    %43 = arith.mulf %27, %35 : vector<8x128xf32>
    %44 = arith.addf %42, %43 : vector<8x128xf32>
    %45 = math.tanh %44 : vector<8x128xf32>
    %46 = arith.mulf %41, %45 : vector<8x128xf32>
    %c1_i32 = arith.constant 1 : i32
    %47 = arith.index_cast %c1_i32 : i32 to index
    %c0_23 = arith.constant 0 : index
    %c0_24 = arith.constant 0 : index
    %48 = vector.load %arg11[%47, %c0_23, %c0_24] : memref<4x8x512xf32, #tpu.memory_space<vmem>>, vector<1x8x512xf32>
    %49 = vector.shape_cast %48 : vector<1x8x512xf32> to vector<8x512xf32>
    %50 = arith.truncf %46 : vector<8x128xf32> to vector<8x128xbf16>
    %c0_25 = arith.constant 0 : index
    %c0_26 = arith.constant 0 : index
    %51 = vector.load %arg5[%c0_25, %c0_26] : memref<128x512xbf16, #tpu.memory_space<vmem>>, vector<128x512xbf16>
    %cst_27 = arith.constant dense<0.000000e+00> : vector<8x512xf32>
    %52 = tpu.matmul %50, %51, %cst_27 {dimension_numbers = #tpu.dot_dimension_numbers<[1], [0], [0], [1], [0, 0, 1, 1], [], []>} : vector<8x128xbf16>, vector<128x512xbf16>, vector<8x512xf32> -> vector<8x512xf32>
    %53 = arith.addf %49, %52 : vector<8x512xf32>
    %54 = vector.extract_strided_slice %53 {offsets = [0, 0], sizes = [8, 128], strides = [1, 1]} : vector<8x512xf32> to vector<8x128xf32>
    %55 = arith.negf %54 : vector<8x128xf32>
    %56 = math.exp %55 : vector<8x128xf32>
    %cst_28 = arith.constant 1.000000e+00 : f32
    %57 = vector.broadcast %cst_28 : f32 to vector<8x128xf32>
    %58 = arith.addf %57, %56 : vector<8x128xf32>
    %59 = arith.divf %57, %58 : vector<8x128xf32>
    %60 = vector.extract_strided_slice %53 {offsets = [0, 128], sizes = [8, 128], strides = [1, 1]} : vector<8x512xf32> to vector<8x128xf32>
    %61 = arith.negf %60 : vector<8x128xf32>
    %62 = math.exp %61 : vector<8x128xf32>
    %cst_29 = arith.constant 1.000000e+00 : f32
    %63 = vector.broadcast %cst_29 : f32 to vector<8x128xf32>
    %64 = arith.addf %63, %62 : vector<8x128xf32>
    %65 = arith.divf %63, %64 : vector<8x128xf32>
    %66 = vector.extract_strided_slice %53 {offsets = [0, 256], sizes = [8, 128], strides = [1, 1]} : vector<8x512xf32> to vector<8x128xf32>
    %67 = math.tanh %66 : vector<8x128xf32>
    %68 = vector.extract_strided_slice %53 {offsets = [0, 384], sizes = [8, 128], strides = [1, 1]} : vector<8x512xf32> to vector<8x128xf32>
    %69 = arith.negf %68 : vector<8x128xf32>
    %70 = math.exp %69 : vector<8x128xf32>
    %cst_30 = arith.constant 1.000000e+00 : f32
    %71 = vector.broadcast %cst_30 : f32 to vector<8x128xf32>
    %72 = arith.addf %71, %70 : vector<8x128xf32>
    %73 = arith.divf %71, %72 : vector<8x128xf32>
    %74 = arith.mulf %65, %44 : vector<8x128xf32>
    %75 = arith.mulf %59, %67 : vector<8x128xf32>
    %76 = arith.addf %74, %75 : vector<8x128xf32>
    %77 = math.tanh %76 : vector<8x128xf32>
    %78 = arith.mulf %73, %77 : vector<8x128xf32>
    %c2_i32 = arith.constant 2 : i32
    %79 = arith.index_cast %c2_i32 : i32 to index
    %c0_31 = arith.constant 0 : index
    %c0_32 = arith.constant 0 : index
    %80 = vector.load %arg11[%79, %c0_31, %c0_32] : memref<4x8x512xf32, #tpu.memory_space<vmem>>, vector<1x8x512xf32>
    %81 = vector.shape_cast %80 : vector<1x8x512xf32> to vector<8x512xf32>
    %82 = arith.truncf %78 : vector<8x128xf32> to vector<8x128xbf16>
    %c0_33 = arith.constant 0 : index
    %c0_34 = arith.constant 0 : index
    %83 = vector.load %arg5[%c0_33, %c0_34] : memref<128x512xbf16, #tpu.memory_space<vmem>>, vector<128x512xbf16>
    %cst_35 = arith.constant dense<0.000000e+00> : vector<8x512xf32>
    %84 = tpu.matmul %82, %83, %cst_35 {dimension_numbers = #tpu.dot_dimension_numbers<[1], [0], [0], [1], [0, 0, 1, 1], [], []>} : vector<8x128xbf16>, vector<128x512xbf16>, vector<8x512xf32> -> vector<8x512xf32>
    %85 = arith.addf %81, %84 : vector<8x512xf32>
    %86 = vector.extract_strided_slice %85 {offsets = [0, 0], sizes = [8, 128], strides = [1, 1]} : vector<8x512xf32> to vector<8x128xf32>
    %87 = arith.negf %86 : vector<8x128xf32>
    %88 = math.exp %87 : vector<8x128xf32>
    %cst_36 = arith.constant 1.000000e+00 : f32
    %89 = vector.broadcast %cst_36 : f32 to vector<8x128xf32>
    %90 = arith.addf %89, %88 : vector<8x128xf32>
    %91 = arith.divf %89, %90 : vector<8x128xf32>
    %92 = vector.extract_strided_slice %85 {offsets = [0, 128], sizes = [8, 128], strides = [1, 1]} : vector<8x512xf32> to vector<8x128xf32>
    %93 = arith.negf %92 : vector<8x128xf32>
    %94 = math.exp %93 : vector<8x128xf32>
    %cst_37 = arith.constant 1.000000e+00 : f32
    %95 = vector.broadcast %cst_37 : f32 to vector<8x128xf32>
    %96 = arith.addf %95, %94 : vector<8x128xf32>
    %97 = arith.divf %95, %96 : vector<8x128xf32>
    %98 = vector.extract_strided_slice %85 {offsets = [0, 256], sizes = [8, 128], strides = [1, 1]} : vector<8x512xf32> to vector<8x128xf32>
    %99 = math.tanh %98 : vector<8x128xf32>
    %100 = vector.extract_strided_slice %85 {offsets = [0, 384], sizes = [8, 128], strides = [1, 1]} : vector<8x512xf32> to vector<8x128xf32>
    %101 = arith.negf %100 : vector<8x128xf32>
    %102 = math.exp %101 : vector<8x128xf32>
    %cst_38 = arith.constant 1.000000e+00 : f32
    %103 = vector.broadcast %cst_38 : f32 to vector<8x128xf32>
    %104 = arith.addf %103, %102 : vector<8x128xf32>
    %105 = arith.divf %103, %104 : vector<8x128xf32>
    %106 = arith.mulf %97, %76 : vector<8x128xf32>
    %107 = arith.mulf %91, %99 : vector<8x128xf32>
    %108 = arith.addf %106, %107 : vector<8x128xf32>
    %109 = math.tanh %108 : vector<8x128xf32>
    %110 = arith.mulf %105, %109 : vector<8x128xf32>
    %c3_i32 = arith.constant 3 : i32
    %111 = arith.index_cast %c3_i32 : i32 to index
    %c0_39 = arith.constant 0 : index
    %c0_40 = arith.constant 0 : index
    %112 = vector.load %arg11[%111, %c0_39, %c0_40] : memref<4x8x512xf32, #tpu.memory_space<vmem>>, vector<1x8x512xf32>
    %113 = vector.shape_cast %112 : vector<1x8x512xf32> to vector<8x512xf32>
    %114 = arith.truncf %110 : vector<8x128xf32> to vector<8x128xbf16>
    %c0_41 = arith.constant 0 : index
    %c0_42 = arith.constant 0 : index
    %115 = vector.load %arg5[%c0_41, %c0_42] : memref<128x512xbf16, #tpu.memory_space<vmem>>, vector<128x512xbf16>
    %cst_43 = arith.constant dense<0.000000e+00> : vector<8x512xf32>
    %116 = tpu.matmul %114, %115, %cst_43 {dimension_numbers = #tpu.dot_dimension_numbers<[1], [0], [0], [1], [0, 0, 1, 1], [], []>} : vector<8x128xbf16>, vector<128x512xbf16>, vector<8x512xf32> -> vector<8x512xf32>
    %117 = arith.addf %113, %116 : vector<8x512xf32>
    %118 = vector.extract_strided_slice %117 {offsets = [0, 0], sizes = [8, 128], strides = [1, 1]} : vector<8x512xf32> to vector<8x128xf32>
    %119 = arith.negf %118 : vector<8x128xf32>
    %120 = math.exp %119 : vector<8x128xf32>
    %cst_44 = arith.constant 1.000000e+00 : f32
    %121 = vector.broadcast %cst_44 : f32 to vector<8x128xf32>
    %122 = arith.addf %121, %120 : vector<8x128xf32>
    %123 = arith.divf %121, %122 : vector<8x128xf32>
    %124 = vector.extract_strided_slice %117 {offsets = [0, 128], sizes = [8, 128], strides = [1, 1]} : vector<8x512xf32> to vector<8x128xf32>
    %125 = arith.negf %124 : vector<8x128xf32>
    %126 = math.exp %125 : vector<8x128xf32>
    %cst_45 = arith.constant 1.000000e+00 : f32
    %127 = vector.broadcast %cst_45 : f32 to vector<8x128xf32>
    %128 = arith.addf %127, %126 : vector<8x128xf32>
    %129 = arith.divf %127, %128 : vector<8x128xf32>
    %130 = vector.extract_strided_slice %117 {offsets = [0, 256], sizes = [8, 128], strides = [1, 1]} : vector<8x512xf32> to vector<8x128xf32>
    %131 = math.tanh %130 : vector<8x128xf32>
    %132 = vector.extract_strided_slice %117 {offsets = [0, 384], sizes = [8, 128], strides = [1, 1]} : vector<8x512xf32> to vector<8x128xf32>
    %133 = arith.negf %132 : vector<8x128xf32>
    %134 = math.exp %133 : vector<8x128xf32>
    %cst_46 = arith.constant 1.000000e+00 : f32
    %135 = vector.broadcast %cst_46 : f32 to vector<8x128xf32>
    %136 = arith.addf %135, %134 : vector<8x128xf32>
    %137 = arith.divf %135, %136 : vector<8x128xf32>
    %138 = arith.mulf %129, %108 : vector<8x128xf32>
    %139 = arith.mulf %123, %131 : vector<8x128xf32>
    %140 = arith.addf %138, %139 : vector<8x128xf32>
    %141 = math.tanh %140 : vector<8x128xf32>
    %142 = arith.mulf %137, %141 : vector<8x128xf32>
    %c4_i32 = arith.constant 4 : i32
    %c0_47 = arith.constant 0 : index
    %c0_48 = arith.constant 0 : index
    %143 = vector.load %arg9[%c0_47, %c0_48] : memref<8x128xf32, #tpu.memory_space<vmem>>, vector<8x128xf32>
    tpu.vector_store %arg9[%c0_47, %c0_48], %142 {strides = array<i32>} : memref<8x128xf32, #tpu.memory_space<vmem>>, vector<8x128xf32>,
    %c0_49 = arith.constant 0 : index
    %c0_50 = arith.constant 0 : index
    %144 = vector.load %arg10[%c0_49, %c0_50] : memref<8x128xf32, #tpu.memory_space<vmem>>, vector<8x128xf32>
    tpu.vector_store %arg10[%c0_49, %c0_50], %140 {strides = array<i32>} : memref<8x128xf32, #tpu.memory_space<vmem>>, vector<8x128xf32>,
    %c1_i32_51 = arith.constant 1 : i32
    %145 = arith.cmpi eq, %arg1, %c1_i32_51 : i32
    %146 = arith.extui %145 : i1 to i32
    %c0_i32_52 = arith.constant 0 : i32
    %147 = arith.cmpi ne, %146, %c0_i32_52 : i32
    scf.if %147 {
      %148 = arith.truncf %142 : vector<8x128xf32> to vector<8x128xbf16>
      %c0_53 = arith.constant 0 : index
      %c0_54 = arith.constant 0 : index
      %149 = vector.load %arg6[%c0_53, %c0_54] : memref<128x128xbf16, #tpu.memory_space<vmem>>, vector<128x128xbf16>
      %cst_55 = arith.constant dense<0.000000e+00> : vector<8x128xf32>
      %150 = tpu.matmul %148, %149, %cst_55 {dimension_numbers = #tpu.dot_dimension_numbers<[1], [0], [0], [1], [0, 0, 1, 1], [], []>} : vector<8x128xbf16>, vector<128x128xbf16>, vector<8x128xf32> -> vector<8x128xf32>
      %c0_56 = arith.constant 0 : index
      %c0_57 = arith.constant 0 : index
      %151 = vector.load %arg7[%c0_56, %c0_57] : memref<1x128xf32, #tpu.memory_space<vmem>>, vector<1x128xf32>
      %152 = vector.broadcast %151 : vector<1x128xf32> to vector<8x128xf32>
      %153 = arith.addf %150, %152 : vector<8x128xf32>
      %cst_58 = arith.constant dense<0xFF800000> : vector<8xf32>
      %154 = vector.multi_reduction <maximumf>, %153, %cst_58 [1] : vector<8x128xf32> to vector<8xf32>
      %155 = vector.shape_cast %154 : vector<8xf32> to vector<8x1xf32>
      %156 = vector.broadcast %155 : vector<8x1xf32> to vector<8x128xf32>
      %157 = arith.subf %153, %156 : vector<8x128xf32>
      %158 = math.exp %157 : vector<8x128xf32>
      %cst_59 = arith.constant dense<0.000000e+00> : vector<8xf32>
      %159 = vector.multi_reduction <add>, %158, %cst_59 [1] : vector<8x128xf32> to vector<8xf32>
      %160 = vector.shape_cast %159 : vector<8xf32> to vector<8x1xf32>
      %161 = math.log %160 : vector<8x1xf32>
      %162 = vector.broadcast %161 : vector<8x1xf32> to vector<8x128xf32>
      %163 = arith.subf %157, %162 : vector<8x128xf32>
      %c0_60 = arith.constant 0 : index
      %c0_61 = arith.constant 0 : index
      %164 = vector.load %arg8[%c0_60, %c0_61] : memref<8x128xf32, #tpu.memory_space<vmem>>, vector<8x128xf32>
      tpu.vector_store %arg8[%c0_60, %c0_61], %163 {strides = array<i32>} : memref<8x128xf32, #tpu.memory_space<vmem>>, vector<8x128xf32>,
    } else {
    }
    return
  }
  func.func @transform_0(%arg0: i32, %arg1: i32) -> (i32, i32, i32) {
    %c0_i32 = arith.constant 0 : i32
    %c0_i32_0 = arith.constant 0 : i32
    return %arg1, %arg0, %c0_i32 : i32, i32, i32
  }
  func.func @transform_1(%arg0: i32, %arg1: i32) -> (i32, i32) {
    %c0_i32 = arith.constant 0 : i32
    %c0_i32_0 = arith.constant 0 : i32
    %c0_i32_1 = arith.constant 0 : i32
    return %c0_i32, %c0_i32_0 : i32, i32
  }
  func.func @transform_2(%arg0: i32, %arg1: i32) -> (i32, i32) {
    %c0_i32 = arith.constant 0 : i32
    %c0_i32_0 = arith.constant 0 : i32
    %c0_i32_1 = arith.constant 0 : i32
    return %c0_i32, %c0_i32_0 : i32, i32
  }
  func.func @transform_3(%arg0: i32, %arg1: i32) -> (i32, i32) {
    %c0_i32 = arith.constant 0 : i32
    %c0_i32_0 = arith.constant 0 : i32
    %c0_i32_1 = arith.constant 0 : i32
    return %c0_i32, %c0_i32_0 : i32, i32
  }
  func.func @transform_4(%arg0: i32, %arg1: i32) -> (i32, i32) {
    %c0_i32 = arith.constant 0 : i32
    %c0_i32_0 = arith.constant 0 : i32
    %c0_i32_1 = arith.constant 0 : i32
    return %c0_i32, %c0_i32_0 : i32, i32
  }
  func.func @transform_5(%arg0: i32, %arg1: i32) -> (i32, i32) {
    %c0_i32 = arith.constant 0 : i32
    %c0_i32_0 = arith.constant 0 : i32
    %c0_i32_1 = arith.constant 0 : i32
    return %c0_i32, %c0_i32_0 : i32, i32
  }
  func.func @transform_6(%arg0: i32, %arg1: i32) -> (i32, i32) {
    %c0_i32 = arith.constant 0 : i32
    %c0_i32_0 = arith.constant 0 : i32
    return %arg0, %c0_i32 : i32, i32
  }
}

</mosaic_0001>

<llo_original>
// kernel: tpu_custom_call.1
$region0: #{tpu_custom_call.1}
  #allocation0 [shape = 'u32[]', space=smem, size = 0x4, offset = 0x4, fixed_abs, tag = 'smem constant byte address 0x4 - core index']
  #allocation1 [shape = 'u32[144,128]{1,0:T(1,128)}', space=vmem, size = 0x12000, scoped, tag = 'internal scratch']
  #allocation2 [shape = 'f32[8,128]{1,0:T(8,128)}', space=vmem, size = 0x1000, scoped, tag = 'scratch operand']
  #allocation3 [shape = 'f32[8,128]{1,0:T(8,128)}', space=vmem, size = 0x1000, scoped, tag = 'scratch operand']
  #allocation4 [shape = 'f32[4,8,512]{2,1,0:T(8,128)}', space=vmem, size = 0x10000, scoped, tag = 'scratch operand']
  %s0 = inlined_call_operand.hbm [shape: f32[8,8,32], index: 0, kind: input, shape index: {}]
  %s1 = inlined_call_operand.hbm [shape: bf16[32,512], index: 1, kind: input, shape index: {}]
  %s2 = inlined_call_operand.vmem [shape: f32[1,512], index: 2, kind: input, shape index: {}]
  %s3 = inlined_call_operand.hbm [shape: bf16[128,512], index: 3, kind: input, shape index: {}]
  %s4 = inlined_call_operand.hbm [shape: bf16[128,128], index: 4, kind: input, shape index: {}]
  %s5 = inlined_call_operand.vmem [shape: f32[1,128], index: 5, kind: input, shape index: {}]
  %s6 = inlined_call_operand.hbm [shape: f32[8,128], index: 6, kind: output, shape index: {}]
  %s7 = sld [smem:[#allocation0]]
  $region81: #{tpu_custom_call.1} parent=0
    _
  %s9 = ssub.s32 1, %s7
  %s10 = scalar_select 0, %s9, %s7
  $region1: #{tpu_custom_call.1} parent=0
    #allocation5 [shape = 'u8[32768]{0}', space=vmem, size = 0x8000, scoped, tag = 'input window, operand 0']
    #allocation6 [shape = 's32[2]{0}', space=sflag, size = 0x8, scoped, tag = 'scoped memory for tpu_custom_call.1']
    #allocation7 [shape = 's32[2]{0}', space=sflag, size = 0x8, scoped, tag = 'scoped memory for tpu_custom_call.1']
    #allocation8 [shape = 'u8[32768]{0}', space=vmem, size = 0x8000, scoped, tag = 'input window, operand 1, single buffered']
    #allocation9 [shape = 's32[1]{0}', space=sflag, size = 0x4, scoped, tag = 'scoped memory for tpu_custom_call.1']
    #allocation10 [shape = 'u8[131072]{0}', space=vmem, size = 0x20000, scoped, tag = 'input window, operand 3, single buffered']
    #allocation11 [shape = 'u8[32768]{0}', space=vmem, size = 0x8000, scoped, tag = 'input window, operand 4, single buffered']
    #allocation12 [shape = 's32[1]{0}', space=sflag, size = 0x4, scoped, tag = 'scoped memory for tpu_custom_call.1']
    #allocation13 [shape = 'u8[4096]{0}', space=vmem, size = 0x1000, scoped, tag = 'output window, operand 0, single buffered']
    %11 = vsyncpa [#allocation6], 0
    %s12 = scalar_lea.sflag [#allocation6], 1
    %13 = vsyncpa %s12, 0
    %14 = vsyncpa [#allocation9], 0
    %15 = vsyncpa [#allocation12], 0
    %16 = vsyncpa [#allocation7], 0
    loop: start=0, step=1, limit=4
    $region2: #{tpu_custom_call.1} parent=1 // loop_pre_header
      _
    $region3: #{tpu_custom_call.1} parent=1 // loop_header
      %s18 = sphi 0, %s22
      %p19 = scmp.ge.s32.totalorder %s18, 4
      %s25 = sphi 0, %s37
      %s26 = sphi 0, %s33
      %s27 = sphi 0, %s25
      %s28 = sphi 0, %s26
      %s29 = sphi 0, %s27
      %s30 = sphi 0, %s28
      %s42 = sphi 0, %s44
      %s45 = sphi 0, %s42
      %s46 = sphi 0, %s45
      %s62 = sphi 0, %s46
      %s66 = sphi 0, %s66
      %s68 = sphi 0, %s66
      %s69 = sphi 0, %s68
      %s83 = sphi 0, %s69
      %s87 = sphi 0, %s87
      %s89 = sphi 0, %s87
      %s90 = sphi 0, %s89
      %s104 = sphi 0, %s90
      %s108 = sphi 0, %s108
      %s110 = sphi 0, %s108
      %s111 = sphi 0, %s110
      %s125 = sphi 0, %s111
      %s129 = sphi 0, %s129
      %s131 = sphi 0, %s129
      %s132 = sphi 0, %s131
      %s146 = sphi 0, %s132
      %s150 = sphi 0, %s150
      %s152 = sphi 0, %s150
      %s153 = sphi 0, %s152
      %s167 = sphi 0, %s153
      %s173 = sphi 0, %s175
      %s176 = sphi 0, %s173
      %s177 = sphi 0, %s176
      %s193 = sphi 0, %s177
    $region4: #{tpu_custom_call.1} parent=1 // loop_header_branch
      %21 = sbr.rel (%p19) target = $region8
    $region5: #{tpu_custom_call.1} parent=1 // loop_body
      %s23 = ssub.s32 %s18, 1
      %s24 = ssub.s32 %s18, 2
      %s31 = sadd.s32 1, %s26
      %p32 = scmp.ge.s32.totalorder %s31, 2
      %s33 = scalar_select %p32, 0, %s31
      %s34 = sadd.s32 1, %s25
      %s35 = scalar_select %p32, %s34, %s25
      %p36 = scmp.ge.s32.totalorder %s35, 1
      %s37 = scalar_select %p36, 0, %s35
      %s38 = ssub.s32 %s26, %s33
      %s39 = ssub.s32 %s25, %s37
      %s40 = sor.u32 %s38, %s39
      %p41 = scmp.eq.s32.totalorder %s40, 0
      %s43 = sadd.s32 %s42, 1
      %s44 = scalar_select %p41, %s42, %s43
      %p47 = pneg %p41
      %p48 = scmp.eq.s32.totalorder %s18, 1
      %p49 = por %p47, %p48
      %p50 = scmp.ne.s32.totalorder %s42, %s45
      %p51 = scmp.eq.s32.totalorder %s18, 0
      %p52 = por %p50, %p51
      %p53 = scmp.ne.s32.totalorder %s42, %s45
      %p54 = scmp.eq.s32.totalorder %s23, 1
      %p55 = por %p53, %p54
      %p56 = scmp.ne.s32.totalorder %s45, %s46
      %p57 = scmp.eq.s32.totalorder %s23, 0
      %p58 = por %p56, %p57
      %p59 = scmp.ne.s32.totalorder %s45, %s46
      %p60 = scmp.eq.s32.totalorder %s24, 1
      %p61 = por %p59, %p60
      %p63 = scmp.ne.s32.totalorder %s46, %s62
      %p64 = scmp.eq.s32.totalorder %s24, 0
      %p65 = por %p63, %p64
      %s67 = sadd.s32 %s66, 1
      %p70 = scmp.eq.s32.totalorder %s18, 1
      %p71 = scmp.ne.s32.totalorder %s66, %s68
      %p72 = scmp.eq.s32.totalorder %s18, 0
      %p73 = por %p71, %p72
      %p74 = scmp.ne.s32.totalorder %s66, %s68
      %p75 = scmp.eq.s32.totalorder %s23, 1
      %p76 = por %p74, %p75
      %p77 = scmp.ne.s32.totalorder %s68, %s69
      %p78 = scmp.eq.s32.totalorder %s23, 0
      %p79 = por %p77, %p78
      %p80 = scmp.ne.s32.totalorder %s68, %s69
      %p81 = scmp.eq.s32.totalorder %s24, 1
      %p82 = por %p80, %p81
      %p84 = scmp.ne.s32.totalorder %s69, %s83
      %p85 = scmp.eq.s32.totalorder %s24, 0
      %p86 = por %p84, %p85
      %s88 = sadd.s32 %s87, 1
      %p91 = scmp.eq.s32.totalorder %s18, 1
      %p92 = scmp.ne.s32.totalorder %s87, %s89
      %p93 = scmp.eq.s32.totalorder %s18, 0
      %p94 = por %p92, %p93
      %p95 = scmp.ne.s32.totalorder %s87, %s89
      %p96 = scmp.eq.s32.totalorder %s23, 1
      %p97 = por %p95, %p96
      %p98 = scmp.ne.s32.totalorder %s89, %s90
      %p99 = scmp.eq.s32.totalorder %s23, 0
      %p100 = por %p98, %p99
      %p101 = scmp.ne.s32.totalorder %s89, %s90
      %p102 = scmp.eq.s32.totalorder %s24, 1
      %p103 = por %p101, %p102
      %p105 = scmp.ne.s32.totalorder %s90, %s104
      %p106 = scmp.eq.s32.totalorder %s24, 0
      %p107 = por %p105, %p106
      %s109 = sadd.s32 %s108, 1
      %p112 = scmp.eq.s32.totalorder %s18, 1
      %p113 = scmp.ne.s32.totalorder %s108, %s110
      %p114 = scmp.eq.s32.totalorder %s18, 0
      %p115 = por %p113, %p114
      %p116 = scmp.ne.s32.totalorder %s108, %s110
      %p117 = scmp.eq.s32.totalorder %s23, 1
      %p118 = por %p116, %p117
      %p119 = scmp.ne.s32.totalorder %s110, %s111
      %p120 = scmp.eq.s32.totalorder %s23, 0
      %p121 = por %p119, %p120
      %p122 = scmp.ne.s32.totalorder %s110, %s111
      %p123 = scmp.eq.s32.totalorder %s24, 1
      %p124 = por %p122, %p123
      %p126 = scmp.ne.s32.totalorder %s111, %s125
      %p127 = scmp.eq.s32.totalorder %s24, 0
      %p128 = por %p126, %p127
      %s130 = sadd.s32 %s129, 1
      %p133 = scmp.eq.s32.totalorder %s18, 1
      %p134 = scmp.ne.s32.totalorder %s129, %s131
      %p135 = scmp.eq.s32.totalorder %s18, 0
      %p136 = por %p134, %p135
      %p137 = scmp.ne.s32.totalorder %s129, %s131
      %p138 = scmp.eq.s32.totalorder %s23, 1
      %p139 = por %p137, %p138
      %p140 = scmp.ne.s32.totalorder %s131, %s132
      %p141 = scmp.eq.s32.totalorder %s23, 0
      %p142 = por %p140, %p141
      %p143 = scmp.ne.s32.totalorder %s131, %s132
      %p144 = scmp.eq.s32.totalorder %s24, 1
      %p145 = por %p143, %p144
      %p147 = scmp.ne.s32.totalorder %s132, %s146
      %p148 = scmp.eq.s32.totalorder %s24, 0
      %p149 = por %p147, %p148
      %s151 = sadd.s32 %s150, 1
      %p154 = scmp.eq.s32.totalorder %s18, 1
      %p155 = scmp.ne.s32.totalorder %s150, %s152
      %p156 = scmp.eq.s32.totalorder %s18, 0
      %p157 = por %p155, %p156
      %p158 = scmp.ne.s32.totalorder %s150, %s152
      %p159 = scmp.eq.s32.totalorder %s23, 1
      %p160 = por %p158, %p159
      %p161 = scmp.ne.s32.totalorder %s152, %s153
      %p162 = scmp.eq.s32.totalorder %s23, 0
      %p163 = por %p161, %p162
      %p164 = scmp.ne.s32.totalorder %s152, %s153
      %p165 = scmp.eq.s32.totalorder %s24, 1
      %p166 = por %p164, %p165
      %p168 = scmp.ne.s32.totalorder %s153, %s167
      %p169 = scmp.eq.s32.totalorder %s24, 0
      %p170 = por %p168, %p169
      %s171 = ssub.s32 %s25, %s37
      %p172 = scmp.eq.s32.totalorder %s171, 0
      %s174 = sadd.s32 %s173, 1
      %s175 = scalar_select %p172, %s173, %s174
      %p178 = pneg %p172
      %p179 = scmp.eq.s32.totalorder %s18, 1
      %p180 = por %p178, %p179
      %p181 = scmp.ne.s32.totalorder %s173, %s176
      %p182 = scmp.eq.s32.totalorder %s18, 0
      %p183 = por %p181, %p182
      %p184 = scmp.ne.s32.totalorder %s173, %s176
      %p185 = scmp.eq.s32.totalorder %s23, 1
      %p186 = por %p184, %p185
      %p187 = scmp.ne.s32.totalorder %s176, %s177
      %p188 = scmp.eq.s32.totalorder %s23, 0
      %p189 = por %p187, %p188
      %p190 = scmp.ne.s32.totalorder %s176, %s177
      %p191 = scmp.eq.s32.totalorder %s24, 1
      %p192 = por %p190, %p191
      %p194 = scmp.ne.s32.totalorder %s177, %s193
      %p195 = scmp.eq.s32.totalorder %s24, 0
      %p196 = por %p194, %p195
      %p197 = scmp.le.s32.totalorder 1, %s18
      %p198 = scmp.lt.s32.totalorder %s18, 3
      %p199 = pnand %p197, %p198
      %p200 = pneg %p199
      // Predicated region
      $region9: #{tpu_custom_call.1} parent=5 // pred_check
        _
      $region10: #{tpu_custom_call.1} parent=5 // pred_check_branch
        %202 = sbr.rel (%p199) target = $region12
      $region11: #{tpu_custom_call.1} parent=5 // pred_region
        %s203 = ssub.s32 %s18, 1
        // Predicated region
        $region13: #{tpu_custom_call.1} parent=11 // pred_check
          %p204 = pneg %p79
        $region14: #{tpu_custom_call.1} parent=11 // pred_check_branch
          %206 = sbr.rel (%p204) target = $region16
        $region15: #{tpu_custom_call.1} parent=11 // pred_region
          %s208 = ssub.s32 1024, 1024
          %209 = vsyncadd [#allocation9], %s208
          %s210 = sshll.u32 [#allocation8], 4
          %s211 = int_to_ptr.vmem [resolvable:$true] %s210
          %216 = dma.hbm_to_vmem [thread:$0]  %s1, 1024, %s211, [#allocation9], 256, 256, 16
        $region16: #{tpu_custom_call.1} parent=11 // pred_fallthru
          _
        // Predicated region
        $region17: #{tpu_custom_call.1} parent=11 // pred_check
          %p217 = pneg %p100
        $region18: #{tpu_custom_call.1} parent=11 // pred_check_branch
          %219 = sbr.rel (%p217) target = $region20
        $region19: #{tpu_custom_call.1} parent=11 // pred_region
          _
        $region20: #{tpu_custom_call.1} parent=11 // pred_fallthru
          _
        // Predicated region
        $region21: #{tpu_custom_call.1} parent=11 // pred_check
          %p220 = pneg %p121
        $region22: #{tpu_custom_call.1} parent=11 // pred_check_branch
          %222 = sbr.rel (%p220) target = $region24
        $region23: #{tpu_custom_call.1} parent=11 // pred_region
          %s224 = ssub.s32 4096, 4096
          %225 = vsyncadd [#allocation9], %s224
          %s226 = sshll.u32 [#allocation10], 4
          %s227 = int_to_ptr.vmem [resolvable:$true] %s226
          %232 = dma.hbm_to_vmem [thread:$0]  %s3, 4096, %s227, [#allocation9], 256, 256, 16
        $region24: #{tpu_custom_call.1} parent=11 // pred_fallthru
          _
        // Predicated region
        $region25: #{tpu_custom_call.1} parent=11 // pred_check
          %p233 = pneg %p142
        $region26: #{tpu_custom_call.1} parent=11 // pred_check_branch
          %235 = sbr.rel (%p233) target = $region28
        $region27: #{tpu_custom_call.1} parent=11 // pred_region
          %s237 = ssub.s32 1024, 1024
          %238 = vsyncadd [#allocation12], %s237
          %s239 = sshll.u32 [#allocation11], 4
          %s240 = int_to_ptr.vmem [resolvable:$true] %s239
          %245 = dma.hbm_to_vmem [thread:$0]  %s4, 1024, %s240, [#allocation12], 64, 64, 4
        $region28: #{tpu_custom_call.1} parent=11 // pred_fallthru
          _
        // Predicated region
        $region29: #{tpu_custom_call.1} parent=11 // pred_check
          %p246 = pneg %p163
        $region30: #{tpu_custom_call.1} parent=11 // pred_check_branch
          %248 = sbr.rel (%p246) target = $region32
        $region31: #{tpu_custom_call.1} parent=11 // pred_region
          _
        $region32: #{tpu_custom_call.1} parent=11 // pred_fallthru
          _
      $region12: #{tpu_custom_call.1} parent=5 // pred_fallthru
        _
      %p249 = scmp.lt.s32.totalorder %s18, 2
      // Predicated region
      $region33: #{tpu_custom_call.1} parent=5 // pred_check
        %p250 = pneg %p249
      $region34: #{tpu_custom_call.1} parent=5 // pred_check_branch
        %252 = sbr.rel (%p250) target = $region36
      $region35: #{tpu_custom_call.1} parent=5 // pred_region
        // Predicated region
        $region37: #{tpu_custom_call.1} parent=35 // pred_check
          %p253 = pneg %p52
        $region38: #{tpu_custom_call.1} parent=35 // pred_check_branch
          %255 = sbr.rel (%p253) target = $region40
        $region39: #{tpu_custom_call.1} parent=35 // pred_region
          %s256 = sand.u32 %s42, 1
          %s257 = scalar_lea.sflag [#allocation6], %s256
          %s258 = sand.u32 %s42, 1
          %s259 = smul.addr %s258, 32
          %s260 = scalar_lea.vmem [#allocation5], %s259
          %s261 = smul.u32 4, %s26
          %s263 = ssub.s32 512, 512
          %264 = vsyncadd %s257, %s263
          %s265 = sadd.s32 %s25, %s261
          %s266 = smul.addr %s265, 128
          %s267 = scalar_lea.hbm %s0, %s266
          %s268 = sshll.u32 %s260, 4
          %s269 = int_to_ptr.vmem [resolvable:$true] %s268
          %274 = dma.hbm_to_vmem [thread:$0]  %s267, 512, %s269, %s257, 128, 128, 8
        $region40: #{tpu_custom_call.1} parent=35 // pred_fallthru
          _
      $region36: #{tpu_custom_call.1} parent=5 // pred_fallthru
        _
      %p275 = scmp.le.s32.totalorder 1, %s18
      %p276 = scmp.lt.s32.totalorder %s18, 3
      %p277 = pnand %p275, %p276
      %p278 = pneg %p277
      // Predicated region
      $region41: #{tpu_custom_call.1} parent=5 // pred_check
        _
      $region42: #{tpu_custom_call.1} parent=5 // pred_check_branch
        %280 = sbr.rel (%p277) target = $region44
      $region43: #{tpu_custom_call.1} parent=5 // pred_region
        %s281 = ssub.s32 %s18, 1
        %s282 = sand.u32 %s45, 1
        %s283 = scalar_lea.sflag [#allocation6], %s282
        %s284 = sand.u32 %s45, 1
        %s285 = smul.addr %s284, 32
        %s286 = scalar_lea.vmem [#allocation5], %s285
        // Predicated region
        $region45: #{tpu_custom_call.1} parent=43 // pred_check
          %p287 = pneg %p58
        $region46: #{tpu_custom_call.1} parent=43 // pred_check_branch
          %289 = sbr.rel (%p287) target = $region48
        $region47: #{tpu_custom_call.1} parent=43 // pred_region
          %290 = dma.done %s283, 512
        $region48: #{tpu_custom_call.1} parent=43 // pred_fallthru
          _
        // Predicated region
        $region49: #{tpu_custom_call.1} parent=43 // pred_check
          %p291 = pneg %p79
        $region50: #{tpu_custom_call.1} parent=43 // pred_check_branch
          %293 = sbr.rel (%p291) target = $region52
        $region51: #{tpu_custom_call.1} parent=43 // pred_region
          %294 = dma.done [#allocation9], 1024
        $region52: #{tpu_custom_call.1} parent=43 // pred_fallthru
          _
        // Predicated region
        $region53: #{tpu_custom_call.1} parent=43 // pred_check
          %p295 = pneg %p121
        $region54: #{tpu_custom_call.1} parent=43 // pred_check_branch
          %297 = sbr.rel (%p295) target = $region56
        $region55: #{tpu_custom_call.1} parent=43 // pred_region
          %298 = dma.done [#allocation9], 4096
        $region56: #{tpu_custom_call.1} parent=43 // pred_fallthru
          _
        // Predicated region
        $region57: #{tpu_custom_call.1} parent=43 // pred_check
          %p299 = pneg %p142
        $region58: #{tpu_custom_call.1} parent=43 // pred_check_branch
          %301 = sbr.rel (%p299) target = $region60
        $region59: #{tpu_custom_call.1} parent=43 // pred_region
          %302 = dma.done [#allocation12], 1024
        $region60: #{tpu_custom_call.1} parent=43 // pred_fallthru
          _
        %s303 = sand.u32 %s45, 1
        %s304 = scalar_lea.sflag [#allocation6], %s303
        %s305 = sand.u32 %s45, 1
        %s306 = smul.addr %s305, 32
        %s307 = scalar_lea.vmem [#allocation5], %s306
        %p308 = pneg %p58
        %p309 = pneg %p55
        %p310 = pneg %p79
        %p311 = pneg %p76
        %p312 = pneg %p100
        %p313 = pneg %p97
        %p314 = pneg %p121
        %p315 = pneg %p118
        %p316 = pneg %p142
        %p317 = pneg %p139
        %p318 = pneg %p163
        %p319 = pneg %p160
        %p320 = pneg %p189
        %p321 = pneg %p186
        %s322 = smul.u32 4, %s28
        %p324 = scmp.eq.s32.totalorder %s28, 0
        // Predicated region
        $region61: #{tpu_custom_call.1} parent=43 // pred_check
          %p325 = pneg %p324
        $region62: #{tpu_custom_call.1} parent=43 // pred_check_branch
          %327 = sbr.rel (%p325) target = $region64
        $region63: #{tpu_custom_call.1} parent=43 // pred_region
          %328 = vst [vmem:[#allocation2] sm:$0xff] 0.0
          %329 = vst [vmem:[#allocation3] sm:$0xff] 0.0
        $region64: #{tpu_custom_call.1} parent=43 // pred_fallthru
          _
        %v330 = vld [vmem:[%s286] sm:$0xff]
        %v331 = vld [vmem:[%s286 + $0x8] sm:$0xff]
        %v332 = vld [vmem:[%s286 + $0x10] sm:$0xff]
        %v333 = vld [vmem:[%s286 + $0x18] sm:$0xff]
        %v334 = vpack.c.bf16 %v330, %v330
        %v335 = vpack.c.bf16 %v331, %v331
        %v336 = vpack.c.bf16 %v332, %v332
        %v337 = vpack.c.bf16 %v333, %v333
        %v338 = vld [vmem:[#allocation8] sm:$0xff]
        %v339 = vld [vmem:[#allocation8 + $0x8] sm:$0xff]
        %v340 = vld [vmem:[#allocation8 + $0x10] sm:$0xff]
        %v341 = vld [vmem:[#allocation8 + $0x18] sm:$0xff]
        %v342 = vld [vmem:[#allocation8 + $0x20] sm:$0xff]
        %v343 = vld [vmem:[#allocation8 + $0x28] sm:$0xff]
        %v344 = vld [vmem:[#allocation8 + $0x30] sm:$0xff]
        %v345 = vld [vmem:[#allocation8 + $0x38] sm:$0xff]
        %v346 = vld [vmem:[%s2] sm:$0xf]
        %v348 = vlaneseq
        %v349 = vshrl.u32 %v348, 7
        %v350 = vsub.s32 0, %v349
        %v351 = vrot.slane %v346, %v350
        %v352 = vlaneseq
        %v353 = vshrl.u32 %v352, 7
        %v354 = vsub.s32 1, %v353
        %v355 = vrot.slane %v346, %v354
        %v356 = vlaneseq
        %v357 = vshrl.u32 %v356, 7
        %v358 = vsub.s32 2, %v357
        %v359 = vrot.slane %v346, %v358
        %v360 = vlaneseq
        %v361 = vshrl.u32 %v360, 7
        %v362 = vsub.s32 3, %v361
        %v363 = vrot.slane %v346, %v362
        %v372 = vunpack.c.l.b16 %v334
        %v373 = vunpack.c.l.b16 %v335
        %v374 = vunpack.c.l.b16 %v336
        %v375 = vunpack.c.l.b16 %v337
        %v376 = vpack.c.b16 %v373, %v372
        %v377 = vpack.c.b16 %v375, %v374
        %v386 = vunpack.c.l.b16 %v338
        %v387 = vunpack.c.h.b16 %v338
        %v388 = vunpack.c.l.b16 %v339
        %v389 = vunpack.c.h.b16 %v339
        %v390 = vunpack.c.l.b16 %v340
        %v391 = vunpack.c.h.b16 %v340
        %v392 = vunpack.c.l.b16 %v341
        %v393 = vunpack.c.h.b16 %v341
        %v394 = vunpack.c.l.b16 %v342
        %v395 = vunpack.c.h.b16 %v342
        %v396 = vunpack.c.l.b16 %v343
        %v397 = vunpack.c.h.b16 %v343
        %v398 = vunpack.c.l.b16 %v344
        %v399 = vunpack.c.h.b16 %v344
        %v400 = vunpack.c.l.b16 %v345
        %v401 = vunpack.c.h.b16 %v345
        %v402 = vpack.c.b16 %v390, %v386
        %v403 = vpack.c.b16 %v391, %v387
        %v404 = vpack.c.b16 %v392, %v388
        %v405 = vpack.c.b16 %v393, %v389
        %v406 = vpack.c.b16 %v398, %v394
        %v407 = vpack.c.b16 %v399, %v395
        %v408 = vpack.c.b16 %v400, %v396
        %v409 = vpack.c.b16 %v401, %v397
        %vm418 = vcmask 261120
        %v420 = vsel %vm418, %v376, 0
        %v423 = vsel %vm418, %v377, 0
        %425 = vmatprep.subr.bf16.mxu0 %v403
        %426 = vmatpush1.bf16.msra.mxu0 %v402
        %427 = vmatprep.subr.bf16.mxu0 %v407
        %428 = vmatpush1.bf16.msra.mxu0 %v406
        %429 = vmatprep.subr.bf16.mxu0 0
        %430 = vmatpush1.bf16.msra.mxu0 0
        %431 = vmatprep.subr.bf16.mxu0 0
        %432 = vmatpush1.bf16.msra.mxu0 0
        %433 = vmatprep.subr.bf16.mxu0 0
        %434 = vmatpush1.bf16.msra.mxu0 0
        %435 = vmatprep.subr.bf16.mxu0 0
        %436 = vmatpush1.bf16.msra.mxu0 0
        %437 = vmatprep.subr.bf16.mxu0 0
        %438 = vmatpush1.bf16.msra.mxu0 0
        %439 = vmatprep.subr.bf16.mxu0 0
        %440 = vmatpush1.bf16.msra.mxu0 0
        %441 = vmatprep.subr.bf16.mxu0 0
        %442 = vmatpush1.bf16.msra.mxu0 0
        %443 = vmatprep.subr.bf16.mxu0 0
        %444 = vmatpush1.bf16.msra.mxu0 0
        %445 = vmatprep.subr.bf16.mxu0 0
        %446 = vmatpush1.bf16.msra.mxu0 0
        %447 = vmatprep.subr.bf16.mxu0 0
        %448 = vmatpush1.bf16.msra.mxu0 0
        %449 = vmatprep.subr.bf16.mxu0 0
        %450 = vmatpush1.bf16.msra.mxu0 0
        %451 = vmatprep.subr.bf16.mxu0 0
        %452 = vmatpush1.bf16.msra.mxu0 0
        %453 = vmatprep.subr.bf16.mxu0 0
        %454 = vmatpush1.bf16.msra.mxu0 0
        %455 = vmatprep.subr.bf16.mxu0 0
        %456 = vmatpush1.bf16.msra.mxu0 0
        %457 = vmatprep.mubr.bf16.mxu0 0
        %458 = vmatmul.mubr.bf16.gmra.mrb[0].mxu0 %v420
        %v459 = vpop.f32.mrb[0].mxu0
        %v460 = vadd.f32 %v351, %v459
        %v461 = vpop.f32.mrb[0].mxu0
        %v462 = vadd.f32 %v355, %v461
        %v463 = vpop.f32.mrb[0].mxu0
        %v464 = vadd.f32 %v351, %v463
        %v465 = vpop.f32.mrb[0].mxu0
        %v466 = vadd.f32 %v355, %v465
        %467 = vmatprep.mubr.bf16.mxu0 0
        %468 = vmatmul.mubr.bf16.gmra.mrb[0].mxu0 %v423
        %v469 = vpop.f32.mrb[0].mxu0
        %v470 = vadd.f32 %v351, %v469
        %v471 = vpop.f32.mrb[0].mxu0
        %v472 = vadd.f32 %v355, %v471
        %v473 = vpop.f32.mrb[0].mxu0
        %v474 = vadd.f32 %v351, %v473
        %v475 = vpop.f32.mrb[0].mxu0
        %v476 = vadd.f32 %v355, %v475
        %477 = vdwg.mxu0
        %478 = vmatprep.subr.bf16.mxu0 %v405
        %479 = vmatpush1.bf16.msra.mxu0 %v404
        %480 = vmatprep.subr.bf16.mxu0 %v409
        %481 = vmatpush1.bf16.msra.mxu0 %v408
        %482 = vmatprep.subr.bf16.mxu0 0
        %483 = vmatpush1.bf16.msra.mxu0 0
        %484 = vmatprep.subr.bf16.mxu0 0
        %485 = vmatpush1.bf16.msra.mxu0 0
        %486 = vmatprep.subr.bf16.mxu0 0
        %487 = vmatpush1.bf16.msra.mxu0 0
        %488 = vmatprep.subr.bf16.mxu0 0
        %489 = vmatpush1.bf16.msra.mxu0 0
        %490 = vmatprep.subr.bf16.mxu0 0
        %491 = vmatpush1.bf16.msra.mxu0 0
        %492 = vmatprep.subr.bf16.mxu0 0
        %493 = vmatpush1.bf16.msra.mxu0 0
        %494 = vmatprep.subr.bf16.mxu0 0
        %495 = vmatpush1.bf16.msra.mxu0 0
        %496 = vmatprep.subr.bf16.mxu0 0
        %497 = vmatpush1.bf16.msra.mxu0 0
        %498 = vmatprep.subr.bf16.mxu0 0
        %499 = vmatpush1.bf16.msra.mxu0 0
        %500 = vmatprep.subr.bf16.mxu0 0
        %501 = vmatpush1.bf16.msra.mxu0 0
        %502 = vmatprep.subr.bf16.mxu0 0
        %503 = vmatpush1.bf16.msra.mxu0 0
        %504 = vmatprep.subr.bf16.mxu0 0
        %505 = vmatpush1.bf16.msra.mxu0 0
        %506 = vmatprep.subr.bf16.mxu0 0
        %507 = vmatpush1.bf16.msra.mxu0 0
        %508 = vmatprep.subr.bf16.mxu0 0
        %509 = vmatpush1.bf16.msra.mxu0 0
        %510 = vmatprep.mubr.bf16.mxu0 0
        %511 = vmatmul.mubr.bf16.gmra.mrb[0].mxu0 %v420
        %v512 = vpop.f32.mrb[0].mxu0
        %v513 = vadd.f32 %v359, %v512
        %v514 = vpop.f32.mrb[0].mxu0
        %v515 = vadd.f32 %v363, %v514
        %v516 = vpop.f32.mrb[0].mxu0
        %v517 = vadd.f32 %v359, %v516
        %v518 = vpop.f32.mrb[0].mxu0
        %v519 = vadd.f32 %v363, %v518
        %520 = vmatprep.mubr.bf16.mxu0 0
        %521 = vmatmul.mubr.bf16.gmra.mrb[0].mxu0 %v423
        %v522 = vpop.f32.mrb[0].mxu0
        %v523 = vadd.f32 %v359, %v522
        %v524 = vpop.f32.mrb[0].mxu0
        %v525 = vadd.f32 %v363, %v524
        %v526 = vpop.f32.mrb[0].mxu0
        %v527 = vadd.f32 %v359, %v526
        %v528 = vpop.f32.mrb[0].mxu0
        %v529 = vadd.f32 %v363, %v528
        %530 = vdwg.mxu0
        %531 = vst [vmem:[#allocation4] sm:$0xff] %v460
        %532 = vst [vmem:[#allocation4 + $0x8] sm:$0xff] %v462
        %533 = vst [vmem:[#allocation4 + $0x10] sm:$0xff] %v513
        %534 = vst [vmem:[#allocation4 + $0x18] sm:$0xff] %v515
        %535 = vst [vmem:[#allocation4 + $0x20] sm:$0xff] %v464
        %536 = vst [vmem:[#allocation4 + $0x28] sm:$0xff] %v466
        %537 = vst [vmem:[#allocation4 + $0x30] sm:$0xff] %v517
        %538 = vst [vmem:[#allocation4 + $0x38] sm:$0xff] %v519
        %539 = vst [vmem:[#allocation4 + $0x40] sm:$0xff] %v470
        %540 = vst [vmem:[#allocation4 + $0x48] sm:$0xff] %v472
        %541 = vst [vmem:[#allocation4 + $0x50] sm:$0xff] %v523
        %542 = vst [vmem:[#allocation4 + $0x58] sm:$0xff] %v525
        %543 = vst [vmem:[#allocation4 + $0x60] sm:$0xff] %v474
        %544 = vst [vmem:[#allocation4 + $0x68] sm:$0xff] %v476
        %545 = vst [vmem:[#allocation4 + $0x70] sm:$0xff] %v527
        %546 = vst [vmem:[#allocation4 + $0x78] sm:$0xff] %v529
        %v547 = vld [vmem:[#allocation2] sm:$0xff]
        %v548 = vld [vmem:[#allocation3] sm:$0xff]
        %v549 = vld [vmem:[#allocation4] sm:$0xff]
        %v550 = vld [vmem:[#allocation4 + $0x8] sm:$0xff]
        %v551 = vld [vmem:[#allocation4 + $0x10] sm:$0xff]
        %v552 = vld [vmem:[#allocation4 + $0x18] sm:$0xff]
        %v553 = vpack.c.bf16 %v547, %v547
        %v554 = vld [vmem:[#allocation10] sm:$0xff]
        %v555 = vld [vmem:[#allocation10 + $0x8] sm:$0xff]
        %v556 = vld [vmem:[#allocation10 + $0x10] sm:$0xff]
        %v557 = vld [vmem:[#allocation10 + $0x18] sm:$0xff]
        %v558 = vld [vmem:[#allocation10 + $0x20] sm:$0xff]
        %v559 = vld [vmem:[#allocation10 + $0x28] sm:$0xff]
        %v560 = vld [vmem:[#allocation10 + $0x30] sm:$0xff]
        %v561 = vld [vmem:[#allocation10 + $0x38] sm:$0xff]
        %v562 = vld [vmem:[#allocation10 + $0x40] sm:$0xff]
        %v563 = vld [vmem:[#allocation10 + $0x48] sm:$0xff]
        %v564 = vld [vmem:[#allocation10 + $0x50] sm:$0xff]
        %v565 = vld [vmem:[#allocation10 + $0x58] sm:$0xff]
        %v566 = vld [vmem:[#allocation10 + $0x60] sm:$0xff]
        %v567 = vld [vmem:[#allocation10 + $0x68] sm:$0xff]
        %v568 = vld [vmem:[#allocation10 + $0x70] sm:$0xff]
        %v569 = vld [vmem:[#allocation10 + $0x78] sm:$0xff]
        %v570 = vld [vmem:[#allocation10 + $0x80] sm:$0xff]
        %v571 = vld [vmem:[#allocation10 + $0x88] sm:$0xff]
        %v572 = vld [vmem:[#allocation10 + $0x90] sm:$0xff]
        %v573 = vld [vmem:[#allocation10 + $0x98] sm:$0xff]
        %v574 = vld [vmem:[#allocation10 + $0xa0] sm:$0xff]
        %v575 = vld [vmem:[#allocation10 + $0xa8] sm:$0xff]
        %v576 = vld [vmem:[#allocation10 + $0xb0] sm:$0xff]
        %v577 = vld [vmem:[#allocation10 + $0xb8] sm:$0xff]
        %v578 = vld [vmem:[#allocation10 + $0xc0] sm:$0xff]
        %v579 = vld [vmem:[#allocation10 + $0xc8] sm:$0xff]
        %v580 = vld [vmem:[#allocation10 + $0xd0] sm:$0xff]
        %v581 = vld [vmem:[#allocation10 + $0xd8] sm:$0xff]
        %v582 = vld [vmem:[#allocation10 + $0xe0] sm:$0xff]
        %v583 = vld [vmem:[#allocation10 + $0xe8] sm:$0xff]
        %v584 = vld [vmem:[#allocation10 + $0xf0] sm:$0xff]
        %v585 = vld [vmem:[#allocation10 + $0xf8] sm:$0xff]
        %v618 = vunpack.c.l.b16 %v554
        %v619 = vunpack.c.h.b16 %v554
        %v620 = vunpack.c.l.b16 %v555
        %v621 = vunpack.c.h.b16 %v555
        %v622 = vunpack.c.l.b16 %v556
        %v623 = vunpack.c.h.b16 %v556
        %v624 = vunpack.c.l.b16 %v557
        %v625 = vunpack.c.h.b16 %v557
        %v626 = vunpack.c.l.b16 %v558
        %v627 = vunpack.c.h.b16 %v558
        %v628 = vunpack.c.l.b16 %v559
        %v629 = vunpack.c.h.b16 %v559
        %v630 = vunpack.c.l.b16 %v560
        %v631 = vunpack.c.h.b16 %v560
        %v632 = vunpack.c.l.b16 %v561
        %v633 = vunpack.c.h.b16 %v561
        %v634 = vunpack.c.l.b16 %v562
        %v635 = vunpack.c.h.b16 %v562
        %v636 = vunpack.c.l.b16 %v563
        %v637 = vunpack.c.h.b16 %v563
        %v638 = vunpack.c.l.b16 %v564
        %v639 = vunpack.c.h.b16 %v564
        %v640 = vunpack.c.l.b16 %v565
        %v641 = vunpack.c.h.b16 %v565
        %v642 = vunpack.c.l.b16 %v566
        %v643 = vunpack.c.h.b16 %v566
        %v644 = vunpack.c.l.b16 %v567
        %v645 = vunpack.c.h.b16 %v567
        %v646 = vunpack.c.l.b16 %v568
        %v647 = vunpack.c.h.b16 %v568
        %v648 = vunpack.c.l.b16 %v569
        %v649 = vunpack.c.h.b16 %v569
        %v650 = vunpack.c.l.b16 %v570
        %v651 = vunpack.c.h.b16 %v570
        %v652 = vunpack.c.l.b16 %v571
        %v653 = vunpack.c.h.b16 %v571
        %v654 = vunpack.c.l.b16 %v572
        %v655 = vunpack.c.h.b16 %v572
        %v656 = vunpack.c.l.b16 %v573
        %v657 = vunpack.c.h.b16 %v573
        %v658 = vunpack.c.l.b16 %v574
        %v659 = vunpack.c.h.b16 %v574
        %v660 = vunpack.c.l.b16 %v575
        %v661 = vunpack.c.h.b16 %v575
        %v662 = vunpack.c.l.b16 %v576
        %v663 = vunpack.c.h.b16 %v576
        %v664 = vunpack.c.l.b16 %v577
        %v665 = vunpack.c.h.b16 %v577
        %v666 = vunpack.c.l.b16 %v578
        %v667 = vunpack.c.h.b16 %v578
        %v668 = vunpack.c.l.b16 %v579
        %v669 = vunpack.c.h.b16 %v579
        %v670 = vunpack.c.l.b16 %v580
        %v671 = vunpack.c.h.b16 %v580
        %v672 = vunpack.c.l.b16 %v581
        %v673 = vunpack.c.h.b16 %v581
        %v674 = vunpack.c.l.b16 %v582
        %v675 = vunpack.c.h.b16 %v582
        %v676 = vunpack.c.l.b16 %v583
        %v677 = vunpack.c.h.b16 %v583
        %v678 = vunpack.c.l.b16 %v584
        %v679 = vunpack.c.h.b16 %v584
        %v680 = vunpack.c.l.b16 %v585
        %v681 = vunpack.c.h.b16 %v585
        %v682 = vpack.c.b16 %v622, %v618
        %v683 = vpack.c.b16 %v623, %v619
        %v684 = vpack.c.b16 %v624, %v620
        %v685 = vpack.c.b16 %v625, %v621
        %v686 = vpack.c.b16 %v630, %v626
        %v687 = vpack.c.b16 %v631, %v627
        %v688 = vpack.c.b16 %v632, %v628
        %v689 = vpack.c.b16 %v633, %v629
        %v690 = vpack.c.b16 %v638, %v634
        %v691 = vpack.c.b16 %v639, %v635
        %v692 = vpack.c.b16 %v640, %v636
        %v693 = vpack.c.b16 %v641, %v637
        %v694 = vpack.c.b16 %v646, %v642
        %v695 = vpack.c.b16 %v647, %v643
        %v696 = vpack.c.b16 %v648, %v644
        %v697 = vpack.c.b16 %v649, %v645
        %v698 = vpack.c.b16 %v654, %v650
        %v699 = vpack.c.b16 %v655, %v651
        %v700 = vpack.c.b16 %v656, %v652
        %v701 = vpack.c.b16 %v657, %v653
        %v702 = vpack.c.b16 %v662, %v658
        %v703 = vpack.c.b16 %v663, %v659
        %v704 = vpack.c.b16 %v664, %v660
        %v705 = vpack.c.b16 %v665, %v661
        %v706 = vpack.c.b16 %v670, %v666
        %v707 = vpack.c.b16 %v671, %v667
        %v708 = vpack.c.b16 %v672, %v668
        %v709 = vpack.c.b16 %v673, %v669
        %v710 = vpack.c.b16 %v678, %v674
        %v711 = vpack.c.b16 %v679, %v675
        %v712 = vpack.c.b16 %v680, %v676
        %v713 = vpack.c.b16 %v681, %v677
        %746 = vmatprep.subr.bf16.mxu0 %v683
        %747 = vmatpush1.bf16.msra.mxu0 %v682
        %748 = vmatprep.subr.bf16.mxu0 %v687
        %749 = vmatpush1.bf16.msra.mxu0 %v686
        %750 = vmatprep.subr.bf16.mxu0 %v691
        %751 = vmatpush1.bf16.msra.mxu0 %v690
        %752 = vmatprep.subr.bf16.mxu0 %v695
        %753 = vmatpush1.bf16.msra.mxu0 %v694
        %754 = vmatprep.subr.bf16.mxu0 %v699
        %755 = vmatpush1.bf16.msra.mxu0 %v698
        %756 = vmatprep.subr.bf16.mxu0 %v703
        %757 = vmatpush1.bf16.msra.mxu0 %v702
        %758 = vmatprep.subr.bf16.mxu0 %v707
        %759 = vmatpush1.bf16.msra.mxu0 %v706
        %760 = vmatprep.subr.bf16.mxu0 %v711
        %761 = vmatpush1.bf16.msra.mxu0 %v710
        %762 = vmatprep.subr.bf16.mxu0 0
        %763 = vmatpush1.bf16.msra.mxu0 0
        %764 = vmatprep.subr.bf16.mxu0 0
        %765 = vmatpush1.bf16.msra.mxu0 0
        %766 = vmatprep.subr.bf16.mxu0 0
        %767 = vmatpush1.bf16.msra.mxu0 0
        %768 = vmatprep.subr.bf16.mxu0 0
        %769 = vmatpush1.bf16.msra.mxu0 0
        %770 = vmatprep.subr.bf16.mxu0 0
        %771 = vmatpush1.bf16.msra.mxu0 0
        %772 = vmatprep.subr.bf16.mxu0 0
        %773 = vmatpush1.bf16.msra.mxu0 0
        %774 = vmatprep.subr.bf16.mxu0 0
        %775 = vmatpush1.bf16.msra.mxu0 0
        %776 = vmatprep.subr.bf16.mxu0 0
        %777 = vmatpush1.bf16.msra.mxu0 0
        %778 = vmatprep.mubr.bf16.mxu0 0
        %779 = vmatmul.mubr.bf16.gmra.mrb[0].mxu0 %v553
        %v780 = vpop.f32.mrb[0].mxu0
        %v781 = vadd.f32 0.0, %v780
        %v782 = vpop.f32.mrb[0].mxu0
        %v783 = vadd.f32 0.0, %v782
        %v784 = vpop.f32.mrb[0].mxu0
        %v785 = vpop.f32.mrb[0].mxu0
        %786 = vdwg.mxu0
        %787 = vmatprep.subr.bf16.mxu0 %v685
        %788 = vmatpush1.bf16.msra.mxu0 %v684
        %789 = vmatprep.subr.bf16.mxu0 %v689
        %790 = vmatpush1.bf16.msra.mxu0 %v688
        %791 = vmatprep.subr.bf16.mxu0 %v693
        %792 = vmatpush1.bf16.msra.mxu0 %v692
        %793 = vmatprep.subr.bf16.mxu0 %v697
        %794 = vmatpush1.bf16.msra.mxu0 %v696
        %795 = vmatprep.subr.bf16.mxu0 %v701
        %796 = vmatpush1.bf16.msra.mxu0 %v700
        %797 = vmatprep.subr.bf16.mxu0 %v705
        %798 = vmatpush1.bf16.msra.mxu0 %v704
        %799 = vmatprep.subr.bf16.mxu0 %v709
        %800 = vmatpush1.bf16.msra.mxu0 %v708
        %801 = vmatprep.subr.bf16.mxu0 %v713
        %802 = vmatpush1.bf16.msra.mxu0 %v712
        %803 = vmatprep.subr.bf16.mxu0 0
        %804 = vmatpush1.bf16.msra.mxu0 0
        %805 = vmatprep.subr.bf16.mxu0 0
        %806 = vmatpush1.bf16.msra.mxu0 0
        %807 = vmatprep.subr.bf16.mxu0 0
        %808 = vmatpush1.bf16.msra.mxu0 0
        %809 = vmatprep.subr.bf16.mxu0 0
        %810 = vmatpush1.bf16.msra.mxu0 0
        %811 = vmatprep.subr.bf16.mxu0 0
        %812 = vmatpush1.bf16.msra.mxu0 0
        %813 = vmatprep.subr.bf16.mxu0 0
        %814 = vmatpush1.bf16.msra.mxu0 0
        %815 = vmatprep.subr.bf16.mxu0 0
        %816 = vmatpush1.bf16.msra.mxu0 0
        %817 = vmatprep.subr.bf16.mxu0 0
        %818 = vmatpush1.bf16.msra.mxu0 0
        %819 = vmatprep.mubr.bf16.mxu0 0
        %820 = vmatmul.mubr.bf16.gmra.mrb[0].mxu0 %v553
        %v821 = vpop.f32.mrb[0].mxu0
        %v822 = vadd.f32 0.0, %v821
        %v823 = vpop.f32.mrb[0].mxu0
        %v824 = vadd.f32 0.0, %v823
        %v825 = vpop.f32.mrb[0].mxu0
        %v826 = vpop.f32.mrb[0].mxu0
        %827 = vdwg.mxu0
        %v828 = vadd.f32 %v549, %v781
        %v829 = vadd.f32 %v550, %v783
        %v830 = vadd.f32 %v551, %v822
        %v831 = vadd.f32 %v552, %v824
        %v832 = vxor.u32 %v828, 2147483648
        %v833 = vmul.f32 %v832, 1.442695
        %v834 = vpow.pop %v833
        %v835 = vadd.f32 %v834, 1.0
        %v836 = vrcp.pop %v835
        %v837 = vmul.f32 1.0, %v836
        %v838 = vxor.u32 %v829, 2147483648
        %v839 = vmul.f32 %v838, 1.442695
        %v840 = vpow.pop %v839
        %v841 = vadd.f32 %v840, 1.0
        %v842 = vrcp.pop %v841
        %v843 = vmul.f32 1.0, %v842
        %v844 = vtanh.pop %v830
        %v845 = vxor.u32 %v831, 2147483648
        %v846 = vmul.f32 %v845, 1.442695
        %v847 = vpow.pop %v846
        %v848 = vadd.f32 %v847, 1.0
        %v849 = vrcp.pop %v848
        %v850 = vmul.f32 1.0, %v849
        %v851 = vmul.f32 %v843, %v548
        %v852 = vmul.f32 %v837, %v844
        %v853 = vadd.f32 %v851, %v852
        %v854 = vtanh.pop %v853
        %v855 = vmul.f32 %v850, %v854
        %s856 = scalar_lea.vmem [#allocation4], 32
        %v857 = vld [vmem:[%s856] sm:$0xff]
        %v858 = vld [vmem:[%s856 + $0x8] sm:$0xff]
        %v859 = vld [vmem:[%s856 + $0x10] sm:$0xff]
        %v860 = vld [vmem:[%s856 + $0x18] sm:$0xff]
        %v861 = vpack.c.bf16 %v855, %v855
        %862 = vmatprep.subr.bf16.mxu0 %v683
        %863 = vmatpush1.bf16.msra.mxu0 %v682
        %864 = vmatprep.subr.bf16.mxu0 %v687
        %865 = vmatpush1.bf16.msra.mxu0 %v686
        %866 = vmatprep.subr.bf16.mxu0 %v691
        %867 = vmatpush1.bf16.msra.mxu0 %v690
        %868 = vmatprep.subr.bf16.mxu0 %v695
        %869 = vmatpush1.bf16.msra.mxu0 %v694
        %870 = vmatprep.subr.bf16.mxu0 %v699
        %871 = vmatpush1.bf16.msra.mxu0 %v698
        %872 = vmatprep.subr.bf16.mxu0 %v703
        %873 = vmatpush1.bf16.msra.mxu0 %v702
        %874 = vmatprep.subr.bf16.mxu0 %v707
        %875 = vmatpush1.bf16.msra.mxu0 %v706
        %876 = vmatprep.subr.bf16.mxu0 %v711
        %877 = vmatpush1.bf16.msra.mxu0 %v710
        %878 = vmatprep.subr.bf16.mxu0 0
        %879 = vmatpush1.bf16.msra.mxu0 0
        %880 = vmatprep.subr.bf16.mxu0 0
        %881 = vmatpush1.bf16.msra.mxu0 0
        %882 = vmatprep.subr.bf16.mxu0 0
        %883 = vmatpush1.bf16.msra.mxu0 0
        %884 = vmatprep.subr.bf16.mxu0 0
        %885 = vmatpush1.bf16.msra.mxu0 0
        %886 = vmatprep.subr.bf16.mxu0 0
        %887 = vmatpush1.bf16.msra.mxu0 0
        %888 = vmatprep.subr.bf16.mxu0 0
        %889 = vmatpush1.bf16.msra.mxu0 0
        %890 = vmatprep.subr.bf16.mxu0 0
        %891 = vmatpush1.bf16.msra.mxu0 0
        %892 = vmatprep.subr.bf16.mxu0 0
        %893 = vmatpush1.bf16.msra.mxu0 0
        %894 = vmatprep.mubr.bf16.mxu0 0
        %895 = vmatmul.mubr.bf16.gmra.mrb[0].mxu0 %v861
        %v896 = vpop.f32.mrb[0].mxu0
        %v897 = vadd.f32 0.0, %v896
        %v898 = vpop.f32.mrb[0].mxu0
        %v899 = vadd.f32 0.0, %v898
        %v900 = vpop.f32.mrb[0].mxu0
        %v901 = vpop.f32.mrb[0].mxu0
        %902 = vdwg.mxu0
        %903 = vmatprep.subr.bf16.mxu0 %v685
        %904 = vmatpush1.bf16.msra.mxu0 %v684
        %905 = vmatprep.subr.bf16.mxu0 %v689
        %906 = vmatpush1.bf16.msra.mxu0 %v688
        %907 = vmatprep.subr.bf16.mxu0 %v693
        %908 = vmatpush1.bf16.msra.mxu0 %v692
        %909 = vmatprep.subr.bf16.mxu0 %v697
        %910 = vmatpush1.bf16.msra.mxu0 %v696
        %911 = vmatprep.subr.bf16.mxu0 %v701
        %912 = vmatpush1.bf16.msra.mxu0 %v700
        %913 = vmatprep.subr.bf16.mxu0 %v705
        %914 = vmatpush1.bf16.msra.mxu0 %v704
        %915 = vmatprep.subr.bf16.mxu0 %v709
        %916 = vmatpush1.bf16.msra.mxu0 %v708
        %917 = vmatprep.subr.bf16.mxu0 %v713
        %918 = vmatpush1.bf16.msra.mxu0 %v712
        %919 = vmatprep.subr.bf16.mxu0 0
        %920 = vmatpush1.bf16.msra.mxu0 0
        %921 = vmatprep.subr.bf16.mxu0 0
        %922 = vmatpush1.bf16.msra.mxu0 0
        %923 = vmatprep.subr.bf16.mxu0 0
        %924 = vmatpush1.bf16.msra.mxu0 0
        %925 = vmatprep.subr.bf16.mxu0 0
        %926 = vmatpush1.bf16.msra.mxu0 0
        %927 = vmatprep.subr.bf16.mxu0 0
        %928 = vmatpush1.bf16.msra.mxu0 0
        %929 = vmatprep.subr.bf16.mxu0 0
        %930 = vmatpush1.bf16.msra.mxu0 0
        %931 = vmatprep.subr.bf16.mxu0 0
        %932 = vmatpush1.bf16.msra.mxu0 0
        %933 = vmatprep.subr.bf16.mxu0 0
        %934 = vmatpush1.bf16.msra.mxu0 0
        %935 = vmatprep.mubr.bf16.mxu0 0
        %936 = vmatmul.mubr.bf16.gmra.mrb[0].mxu0 %v861
        %v937 = vpop.f32.mrb[0].mxu0
        %v938 = vadd.f32 0.0, %v937
        %v939 = vpop.f32.mrb[0].mxu0
        %v940 = vadd.f32 0.0, %v939
        %v941 = vpop.f32.mrb[0].mxu0
        %v942 = vpop.f32.mrb[0].mxu0
        %943 = vdwg.mxu0
        %v944 = vadd.f32 %v857, %v897
        %v945 = vadd.f32 %v858, %v899
        %v946 = vadd.f32 %v859, %v938
        %v947 = vadd.f32 %v860, %v940
        %v948 = vxor.u32 %v944, 2147483648
        %v949 = vmul.f32 %v948, 1.442695
        %v950 = vpow.pop %v949
        %v951 = vadd.f32 %v950, 1.0
        %v952 = vrcp.pop %v951
        %v953 = vmul.f32 1.0, %v952
        %v954 = vxor.u32 %v945, 2147483648
        %v955 = vmul.f32 %v954, 1.442695
        %v956 = vpow.pop %v955
        %v957 = vadd.f32 %v956, 1.0
        %v958 = vrcp.pop %v957
        %v959 = vmul.f32 1.0, %v958
        %v960 = vtanh.pop %v946
        %v961 = vxor.u32 %v947, 2147483648
        %v962 = vmul.f32 %v961, 1.442695
        %v963 = vpow.pop %v962
        %v964 = vadd.f32 %v963, 1.0
        %v965 = vrcp.pop %v964
        %v966 = vmul.f32 1.0, %v965
        %v967 = vmul.f32 %v959, %v853
        %v968 = vmul.f32 %v953, %v960
        %v969 = vadd.f32 %v967, %v968
        %v970 = vtanh.pop %v969
        %v971 = vmul.f32 %v966, %v970
        %s972 = scalar_lea.vmem [#allocation4], 64
        %v973 = vld [vmem:[%s972] sm:$0xff]
        %v974 = vld [vmem:[%s972 + $0x8] sm:$0xff]
        %v975 = vld [vmem:[%s972 + $0x10] sm:$0xff]
        %v976 = vld [vmem:[%s972 + $0x18] sm:$0xff]
        %v977 = vpack.c.bf16 %v971, %v971
        %978 = vmatprep.subr.bf16.mxu0 %v683
        %979 = vmatpush1.bf16.msra.mxu0 %v682
        %980 = vmatprep.subr.bf16.mxu0 %v687
        %981 = vmatpush1.bf16.msra.mxu0 %v686
        %982 = vmatprep.subr.bf16.mxu0 %v691
        %983 = vmatpush1.bf16.msra.mxu0 %v690
        %984 = vmatprep.subr.bf16.mxu0 %v695
        %985 = vmatpush1.bf16.msra.mxu0 %v694
        %986 = vmatprep.subr.bf16.mxu0 %v699
        %987 = vmatpush1.bf16.msra.mxu0 %v698
        %988 = vmatprep.subr.bf16.mxu0 %v703
        %989 = vmatpush1.bf16.msra.mxu0 %v702
        %990 = vmatprep.subr.bf16.mxu0 %v707
        %991 = vmatpush1.bf16.msra.mxu0 %v706
        %992 = vmatprep.subr.bf16.mxu0 %v711
        %993 = vmatpush1.bf16.msra.mxu0 %v710
        %994 = vmatprep.subr.bf16.mxu0 0
        %995 = vmatpush1.bf16.msra.mxu0 0
        %996 = vmatprep.subr.bf16.mxu0 0
        %997 = vmatpush1.bf16.msra.mxu0 0
        %998 = vmatprep.subr.bf16.mxu0 0
        %999 = vmatpush1.bf16.msra.mxu0 0
        %1000 = vmatprep.subr.bf16.mxu0 0
        %1001 = vmatpush1.bf16.msra.mxu0 0
        %1002 = vmatprep.subr.bf16.mxu0 0
        %1003 = vmatpush1.bf16.msra.mxu0 0
        %1004 = vmatprep.subr.bf16.mxu0 0
        %1005 = vmatpush1.bf16.msra.mxu0 0
        %1006 = vmatprep.subr.bf16.mxu0 0
        %1007 = vmatpush1.bf16.msra.mxu0 0
        %1008 = vmatprep.subr.bf16.mxu0 0
        %1009 = vmatpush1.bf16.msra.mxu0 0
        %1010 = vmatprep.mubr.bf16.mxu0 0
        %1011 = vmatmul.mubr.bf16.gmra.mrb[0].mxu0 %v977
        %v1012 = vpop.f32.mrb[0].mxu0
        %v1013 = vadd.f32 0.0, %v1012
        %v1014 = vpop.f32.mrb[0].mxu0
        %v1015 = vadd.f32 0.0, %v1014
        %v1016 = vpop.f32.mrb[0].mxu0
        %v1017 = vpop.f32.mrb[0].mxu0
        %1018 = vdwg.mxu0
        %1019 = vmatprep.subr.bf16.mxu0 %v685
        %1020 = vmatpush1.bf16.msra.mxu0 %v684
        %1021 = vmatprep.subr.bf16.mxu0 %v689
        %1022 = vmatpush1.bf16.msra.mxu0 %v688
        %1023 = vmatprep.subr.bf16.mxu0 %v693
        %1024 = vmatpush1.bf16.msra.mxu0 %v692
        %1025 = vmatprep.subr.bf16.mxu0 %v697
        %1026 = vmatpush1.bf16.msra.mxu0 %v696
        %1027 = vmatprep.subr.bf16.mxu0 %v701
        %1028 = vmatpush1.bf16.msra.mxu0 %v700
        %1029 = vmatprep.subr.bf16.mxu0 %v705
        %1030 = vmatpush1.bf16.msra.mxu0 %v704
        %1031 = vmatprep.subr.bf16.mxu0 %v709
        %1032 = vmatpush1.bf16.msra.mxu0 %v708
        %1033 = vmatprep.subr.bf16.mxu0 %v713
        %1034 = vmatpush1.bf16.msra.mxu0 %v712
        %1035 = vmatprep.subr.bf16.mxu0 0
        %1036 = vmatpush1.bf16.msra.mxu0 0
        %1037 = vmatprep.subr.bf16.mxu0 0
        %1038 = vmatpush1.bf16.msra.mxu0 0
        %1039 = vmatprep.subr.bf16.mxu0 0
        %1040 = vmatpush1.bf16.msra.mxu0 0
        %1041 = vmatprep.subr.bf16.mxu0 0
        %1042 = vmatpush1.bf16.msra.mxu0 0
        %1043 = vmatprep.subr.bf16.mxu0 0
        %1044 = vmatpush1.bf16.msra.mxu0 0
        %1045 = vmatprep.subr.bf16.mxu0 0
        %1046 = vmatpush1.bf16.msra.mxu0 0
        %1047 = vmatprep.subr.bf16.mxu0 0
        %1048 = vmatpush1.bf16.msra.mxu0 0
        %1049 = vmatprep.subr.bf16.mxu0 0
        %1050 = vmatpush1.bf16.msra.mxu0 0
        %1051 = vmatprep.mubr.bf16.mxu0 0
        %1052 = vmatmul.mubr.bf16.gmra.mrb[0].mxu0 %v977
        %v1053 = vpop.f32.mrb[0].mxu0
        %v1054 = vadd.f32 0.0, %v1053
        %v1055 = vpop.f32.mrb[0].mxu0
        %v1056 = vadd.f32 0.0, %v1055
        %v1057 = vpop.f32.mrb[0].mxu0
        %v1058 = vpop.f32.mrb[0].mxu0
        %1059 = vdwg.mxu0
        %v1060 = vadd.f32 %v973, %v1013
        %v1061 = vadd.f32 %v974, %v1015
        %v1062 = vadd.f32 %v975, %v1054
        %v1063 = vadd.f32 %v976, %v1056
        %v1064 = vxor.u32 %v1060, 2147483648
        %v1065 = vmul.f32 %v1064, 1.442695
        %v1066 = vpow.pop %v1065
        %v1067 = vadd.f32 %v1066, 1.0
        %v1068 = vrcp.pop %v1067
        %v1069 = vmul.f32 1.0, %v1068
        %v1070 = vxor.u32 %v1061, 2147483648
        %v1071 = vmul.f32 %v1070, 1.442695
        %v1072 = vpow.pop %v1071
        %v1073 = vadd.f32 %v1072, 1.0
        %v1074 = vrcp.pop %v1073
        %v1075 = vmul.f32 1.0, %v1074
        %v1076 = vtanh.pop %v1062
        %v1077 = vxor.u32 %v1063, 2147483648
        %v1078 = vmul.f32 %v1077, 1.442695
        %v1079 = vpow.pop %v1078
        %v1080 = vadd.f32 %v1079, 1.0
        %v1081 = vrcp.pop %v1080
        %v1082 = vmul.f32 1.0, %v1081
        %v1083 = vmul.f32 %v1075, %v969
        %v1084 = vmul.f32 %v1069, %v1076
        %v1085 = vadd.f32 %v1083, %v1084
        %v1086 = vtanh.pop %v1085
        %v1087 = vmul.f32 %v1082, %v1086
        %s1088 = scalar_lea.vmem [#allocation4], 96
        %v1089 = vld [vmem:[%s1088] sm:$0xff]
        %v1090 = vld [vmem:[%s1088 + $0x8] sm:$0xff]
        %v1091 = vld [vmem:[%s1088 + $0x10] sm:$0xff]
        %v1092 = vld [vmem:[%s1088 + $0x18] sm:$0xff]
        %v1093 = vpack.c.bf16 %v1087, %v1087
        %1094 = vmatprep.subr.bf16.mxu0 %v683
        %1095 = vmatpush1.bf16.msra.mxu0 %v682
        %1096 = vmatprep.subr.bf16.mxu0 %v687
        %1097 = vmatpush1.bf16.msra.mxu0 %v686
        %1098 = vmatprep.subr.bf16.mxu0 %v691
        %1099 = vmatpush1.bf16.msra.mxu0 %v690
        %1100 = vmatprep.subr.bf16.mxu0 %v695
        %1101 = vmatpush1.bf16.msra.mxu0 %v694
        %1102 = vmatprep.subr.bf16.mxu0 %v699
        %1103 = vmatpush1.bf16.msra.mxu0 %v698
        %1104 = vmatprep.subr.bf16.mxu0 %v703
        %1105 = vmatpush1.bf16.msra.mxu0 %v702
        %1106 = vmatprep.subr.bf16.mxu0 %v707
        %1107 = vmatpush1.bf16.msra.mxu0 %v706
        %1108 = vmatprep.subr.bf16.mxu0 %v711
        %1109 = vmatpush1.bf16.msra.mxu0 %v710
        %1110 = vmatprep.subr.bf16.mxu0 0
        %1111 = vmatpush1.bf16.msra.mxu0 0
        %1112 = vmatprep.subr.bf16.mxu0 0
        %1113 = vmatpush1.bf16.msra.mxu0 0
        %1114 = vmatprep.subr.bf16.mxu0 0
        %1115 = vmatpush1.bf16.msra.mxu0 0
        %1116 = vmatprep.subr.bf16.mxu0 0
        %1117 = vmatpush1.bf16.msra.mxu0 0
        %1118 = vmatprep.subr.bf16.mxu0 0
        %1119 = vmatpush1.bf16.msra.mxu0 0
        %1120 = vmatprep.subr.bf16.mxu0 0
        %1121 = vmatpush1.bf16.msra.mxu0 0
        %1122 = vmatprep.subr.bf16.mxu0 0
        %1123 = vmatpush1.bf16.msra.mxu0 0
        %1124 = vmatprep.subr.bf16.mxu0 0
        %1125 = vmatpush1.bf16.msra.mxu0 0
        %1126 = vmatprep.mubr.bf16.mxu0 0
        %1127 = vmatmul.mubr.bf16.gmra.mrb[0].mxu0 %v1093
        %v1128 = vpop.f32.mrb[0].mxu0
        %v1129 = vadd.f32 0.0, %v1128
        %v1130 = vpop.f32.mrb[0].mxu0
        %v1131 = vadd.f32 0.0, %v1130
        %v1132 = vpop.f32.mrb[0].mxu0
        %v1133 = vpop.f32.mrb[0].mxu0
        %1134 = vdwg.mxu0
        %1135 = vmatprep.subr.bf16.mxu0 %v685
        %1136 = vmatpush1.bf16.msra.mxu0 %v684
        %1137 = vmatprep.subr.bf16.mxu0 %v689
        %1138 = vmatpush1.bf16.msra.mxu0 %v688
        %1139 = vmatprep.subr.bf16.mxu0 %v693
        %1140 = vmatpush1.bf16.msra.mxu0 %v692
        %1141 = vmatprep.subr.bf16.mxu0 %v697
        %1142 = vmatpush1.bf16.msra.mxu0 %v696
        %1143 = vmatprep.subr.bf16.mxu0 %v701
        %1144 = vmatpush1.bf16.msra.mxu0 %v700
        %1145 = vmatprep.subr.bf16.mxu0 %v705
        %1146 = vmatpush1.bf16.msra.mxu0 %v704
        %1147 = vmatprep.subr.bf16.mxu0 %v709
        %1148 = vmatpush1.bf16.msra.mxu0 %v708
        %1149 = vmatprep.subr.bf16.mxu0 %v713
        %1150 = vmatpush1.bf16.msra.mxu0 %v712
        %1151 = vmatprep.subr.bf16.mxu0 0
        %1152 = vmatpush1.bf16.msra.mxu0 0
        %1153 = vmatprep.subr.bf16.mxu0 0
        %1154 = vmatpush1.bf16.msra.mxu0 0
        %1155 = vmatprep.subr.bf16.mxu0 0
        %1156 = vmatpush1.bf16.msra.mxu0 0
        %1157 = vmatprep.subr.bf16.mxu0 0
        %1158 = vmatpush1.bf16.msra.mxu0 0
        %1159 = vmatprep.subr.bf16.mxu0 0
        %1160 = vmatpush1.bf16.msra.mxu0 0
        %1161 = vmatprep.subr.bf16.mxu0 0
        %1162 = vmatpush1.bf16.msra.mxu0 0
        %1163 = vmatprep.subr.bf16.mxu0 0
        %1164 = vmatpush1.bf16.msra.mxu0 0
        %1165 = vmatprep.subr.bf16.mxu0 0
        %1166 = vmatpush1.bf16.msra.mxu0 0
        %1167 = vmatprep.mubr.bf16.mxu0 0
        %1168 = vmatmul.mubr.bf16.gmra.mrb[0].mxu0 %v1093
        %v1169 = vpop.f32.mrb[0].mxu0
        %v1170 = vadd.f32 0.0, %v1169
        %v1171 = vpop.f32.mrb[0].mxu0
        %v1172 = vadd.f32 0.0, %v1171
        %v1173 = vpop.f32.mrb[0].mxu0
        %v1174 = vpop.f32.mrb[0].mxu0
        %1175 = vdwg.mxu0
        %v1176 = vadd.f32 %v1089, %v1129
        %v1177 = vadd.f32 %v1090, %v1131
        %v1178 = vadd.f32 %v1091, %v1170
        %v1179 = vadd.f32 %v1092, %v1172
        %v1180 = vxor.u32 %v1176, 2147483648
        %v1181 = vmul.f32 %v1180, 1.442695
        %v1182 = vpow.pop %v1181
        %v1183 = vadd.f32 %v1182, 1.0
        %v1184 = vrcp.pop %v1183
        %v1185 = vmul.f32 1.0, %v1184
        %v1186 = vxor.u32 %v1177, 2147483648
        %v1187 = vmul.f32 %v1186, 1.442695
        %v1188 = vpow.pop %v1187
        %v1189 = vadd.f32 %v1188, 1.0
        %v1190 = vrcp.pop %v1189
        %v1191 = vmul.f32 1.0, %v1190
        %v1192 = vtanh.pop %v1178
        %v1193 = vxor.u32 %v1179, 2147483648
        %v1194 = vmul.f32 %v1193, 1.442695
        %v1195 = vpow.pop %v1194
        %v1196 = vadd.f32 %v1195, 1.0
        %v1197 = vrcp.pop %v1196
        %v1198 = vmul.f32 1.0, %v1197
        %v1199 = vmul.f32 %v1191, %v1085
        %v1200 = vmul.f32 %v1185, %v1192
        %v1201 = vadd.f32 %v1199, %v1200
        %v1202 = vtanh.pop %v1201
        %v1203 = vmul.f32 %v1198, %v1202
        %1204 = vst [vmem:[#allocation2] sm:$0xff] %v1203
        %1205 = vst [vmem:[#allocation3] sm:$0xff] %v1201
        %p1206 = scmp.eq.s32.totalorder %s28, 1
        // Predicated region
        $region65: #{tpu_custom_call.1} parent=43 // pred_check
          %p1207 = pneg %p1206
        $region66: #{tpu_custom_call.1} parent=43 // pred_check_branch
          %1209 = sbr.rel (%p1207) target = $region68
        $region67: #{tpu_custom_call.1} parent=43 // pred_region
          %v1210 = vpack.c.bf16 %v1203, %v1203
          %v1211 = vld [vmem:[#allocation11] sm:$0xf]
          %v1212 = vld [vmem:[#allocation11 + $0x4] sm:$0xf]
          %v1213 = vld [vmem:[#allocation11 + $0x8] sm:$0xf]
          %v1214 = vld [vmem:[#allocation11 + $0xc] sm:$0xf]
          %v1215 = vld [vmem:[#allocation11 + $0x10] sm:$0xf]
          %v1216 = vld [vmem:[#allocation11 + $0x14] sm:$0xf]
          %v1217 = vld [vmem:[#allocation11 + $0x18] sm:$0xf]
          %v1218 = vld [vmem:[#allocation11 + $0x1c] sm:$0xf]
          %v1219 = vld [vmem:[#allocation11 + $0x20] sm:$0xf]
          %v1220 = vld [vmem:[#allocation11 + $0x24] sm:$0xf]
          %v1221 = vld [vmem:[#allocation11 + $0x28] sm:$0xf]
          %v1222 = vld [vmem:[#allocation11 + $0x2c] sm:$0xf]
          %v1223 = vld [vmem:[#allocation11 + $0x30] sm:$0xf]
          %v1224 = vld [vmem:[#allocation11 + $0x34] sm:$0xf]
          %v1225 = vld [vmem:[#allocation11 + $0x38] sm:$0xf]
          %v1226 = vld [vmem:[#allocation11 + $0x3c] sm:$0xf]
          %v1227 = vld [vmem:[%s5] sm:$0x1]
          %v1229 = vlaneseq
          %v1230 = vshrl.u32 %v1229, 7
          %v1231 = vsub.s32 0, %v1230
          %v1232 = vrot.slane %v1227, %v1231
          %v1250 = vunpack.c.l.b16 %v1211
          %v1251 = vunpack.c.l.b16 %v1212
          %v1252 = vunpack.c.l.b16 %v1213
          %v1253 = vunpack.c.l.b16 %v1214
          %v1254 = vunpack.c.l.b16 %v1215
          %v1255 = vunpack.c.l.b16 %v1216
          %v1256 = vunpack.c.l.b16 %v1217
          %v1257 = vunpack.c.l.b16 %v1218
          %v1258 = vunpack.c.l.b16 %v1219
          %v1259 = vunpack.c.l.b16 %v1220
          %v1260 = vunpack.c.l.b16 %v1221
          %v1261 = vunpack.c.l.b16 %v1222
          %v1262 = vunpack.c.l.b16 %v1223
          %v1263 = vunpack.c.l.b16 %v1224
          %v1264 = vunpack.c.l.b16 %v1225
          %v1265 = vunpack.c.l.b16 %v1226
          %v1266 = vpack.c.b16 %v1251, %v1250
          %v1267 = vpack.c.b16 %v1253, %v1252
          %v1268 = vpack.c.b16 %v1255, %v1254
          %v1269 = vpack.c.b16 %v1257, %v1256
          %v1270 = vpack.c.b16 %v1259, %v1258
          %v1271 = vpack.c.b16 %v1261, %v1260
          %v1272 = vpack.c.b16 %v1263, %v1262
          %v1273 = vpack.c.b16 %v1265, %v1264
          %1282 = vmatprep.subr.bf16.mxu0 0
          %1283 = vmatpush1.bf16.msra.mxu0 %v1266
          %1284 = vmatprep.subr.bf16.mxu0 0
          %1285 = vmatpush1.bf16.msra.mxu0 %v1267
          %1286 = vmatprep.subr.bf16.mxu0 0
          %1287 = vmatpush1.bf16.msra.mxu0 %v1268
          %1288 = vmatprep.subr.bf16.mxu0 0
          %1289 = vmatpush1.bf16.msra.mxu0 %v1269
          %1290 = vmatprep.subr.bf16.mxu0 0
          %1291 = vmatpush1.bf16.msra.mxu0 %v1270
          %1292 = vmatprep.subr.bf16.mxu0 0
          %1293 = vmatpush1.bf16.msra.mxu0 %v1271
          %1294 = vmatprep.subr.bf16.mxu0 0
          %1295 = vmatpush1.bf16.msra.mxu0 %v1272
          %1296 = vmatprep.subr.bf16.mxu0 0
          %1297 = vmatpush1.bf16.msra.mxu0 %v1273
          %1298 = vmatprep.subr.bf16.mxu0 0
          %1299 = vmatpush1.bf16.msra.mxu0 0
          %1300 = vmatprep.subr.bf16.mxu0 0
          %1301 = vmatpush1.bf16.msra.mxu0 0
          %1302 = vmatprep.subr.bf16.mxu0 0
          %1303 = vmatpush1.bf16.msra.mxu0 0
          %1304 = vmatprep.subr.bf16.mxu0 0
          %1305 = vmatpush1.bf16.msra.mxu0 0
          %1306 = vmatprep.subr.bf16.mxu0 0
          %1307 = vmatpush1.bf16.msra.mxu0 0
          %1308 = vmatprep.subr.bf16.mxu0 0
          %1309 = vmatpush1.bf16.msra.mxu0 0
          %1310 = vmatprep.subr.bf16.mxu0 0
          %1311 = vmatpush1.bf16.msra.mxu0 0
          %1312 = vmatprep.subr.bf16.mxu0 0
          %1313 = vmatpush1.bf16.msra.mxu0 0
          %1314 = vmatprep.mubr.bf16.mxu0 0
          %1315 = vmatmul.mubr.bf16.gmra.mrb[0].mxu0 %v1210
          %v1316 = vpop.f32.mrb[0].mxu0
          %v1317 = vadd.f32 %v1232, %v1316
          %v1318 = vpop.f32.mrb[0].mxu0
          %v1319 = vpop.f32.mrb[0].mxu0
          %v1320 = vpop.f32.mrb[0].mxu0
          %1321 = vdwg.mxu0
          %1322 = vmax.xlane.f32.xlu0 %v1317
          %v1323 = vpop.xlane.xlu0 %1322
          %v1324 = vsub.f32 %v1317, %v1323
          %v1325 = vmul.f32 %v1324, 1.442695
          %v1326 = vpow.pop %v1325
          %1327 = vadd.xlane.f32.xlu0 %v1326
          %v1328 = vpop.xlane.xlu0 %1327
          %v1329 = vlog2.pop %v1328
          %v1330 = vmul.f32 %v1329, 0.6931472
          %v1331 = vsub.f32 %v1324, %v1330
          %1332 = vst [vmem:[#allocation13] sm:$0xff] %v1331
        $region68: #{tpu_custom_call.1} parent=43 // pred_fallthru
          _
        // Predicated region
        $region69: #{tpu_custom_call.1} parent=43 // pred_check
          %p1333 = pneg %p186
        $region70: #{tpu_custom_call.1} parent=43 // pred_check_branch
          %1335 = sbr.rel (%p1333) target = $region72
        $region71: #{tpu_custom_call.1} parent=43 // pred_region
          %s1337 = ssub.s32 128, 128
          %1338 = vsyncadd [#allocation7], %s1337
          %s1339 = smul.addr %s27, 128
          %s1340 = scalar_lea.hbm %s6, %s1339
          %s1342 = sshll.u32 [#allocation13], 4
          %s1343 = int_to_ptr.vmem [resolvable:$true] %s1342
          %1345 = dma.vmem_to_hbm [thread:$0]  %s1343, 128, %s1340, [#allocation7]
        $region72: #{tpu_custom_call.1} parent=43 // pred_fallthru
          _
        // Predicated region
        $region73: #{tpu_custom_call.1} parent=43 // pred_check
          %p1346 = pneg %p186
        $region74: #{tpu_custom_call.1} parent=43 // pred_check_branch
          %1348 = sbr.rel (%p1346) target = $region76
        $region75: #{tpu_custom_call.1} parent=43 // pred_region
          %1349 = dma.done [#allocation7], 128
        $region76: #{tpu_custom_call.1} parent=43 // pred_fallthru
          _
      $region44: #{tpu_custom_call.1} parent=5 // pred_fallthru
        _
      %p1350 = scmp.le.s32.totalorder 2, %s18
      // Predicated region
      $region77: #{tpu_custom_call.1} parent=5 // pred_check
        %p1351 = pneg %p1350
      $region78: #{tpu_custom_call.1} parent=5 // pred_check_branch
        %1353 = sbr.rel (%p1351) target = $region80
      $region79: #{tpu_custom_call.1} parent=5 // pred_region
        %s1354 = ssub.s32 %s18, 2
      $region80: #{tpu_custom_call.1} parent=5 // pred_fallthru
        _
    $region6: #{tpu_custom_call.1} parent=1 // loop_footer
      %s22 = sadd.s32 1, %s18
    $region7: #{tpu_custom_call.1} parent=1 // loop_footer_branch
      %17 = sbr.rel target = $region3
    $region8: #{tpu_custom_call.1} parent=1 // loop_exit
      _
    %1355 = vsyncpa [#allocation6], 1
    %s1356 = scalar_lea.sflag [#allocation6], 1
    %1357 = vsyncpa %s1356, 1
    %1358 = vsyncpa [#allocation9], 1
    %1359 = vsyncpa [#allocation12], 1
    %1360 = vsyncpa [#allocation7], 1
    %s1361 = scalar_lea.sflag [#allocation7], 1
    %1362 = vsyncpa %s1361, 1

</llo_original>
